<compile_context>
chip_gen: v7x
topology: tpu7x:2x2x1
jax: 0.10.0
libtpu: 0.0.40
codegen_flags: <defaults>
</compile_context>

<pallas_src>
import math

import jax
import jax.numpy as jnp
import numpy as np
from jax.experimental import pallas as pl
from jax.experimental.pallas import tpu as pltpu

D = 384            # hidden size fixed by the module (nn.Linear(384, ...))
GB_TARGET = 64     # graphs per grid step -> 2*Gb = 128 fwd-proj rows; multiple of 8


def _att_projwithgate_kernel(emb_ref, wl_ref, wf_ref, bf_ref, out_ref):
    """emb_ref: (Gb, N, D) block of graphs; wl_ref: (D, 128) fused logit weight;
    wf_ref: (D, D) fwd_proj weight^T; bf_ref: (1, D) fwd_proj bias;
    out_ref: (2, Gb, D) with [0] = mask branch, [1] = aug branch."""
    gb, n, d = emb_ref.shape
    e = emb_ref[...]                                      # (Gb, N, D) f32

    # --- attention logits for BOTH branches from one lane-aligned MXU call ---
    #   lane 0: mask branch = emb @ (gate_w^T att_w^T)
    #   lane 1: aug  branch = emb @ ((I + gate_w^T) att_w^T)
    # (att_b and gate_b.att_w^T shift every node of a graph equally and cancel
    #  under the node-axis softmax; see the wl construction in the wrapper.)
    lg = jnp.dot(e.reshape(gb * n, d), wl_ref[...],
                 preferred_element_type=jnp.float32)      # (Gb*N, 128)
    logits = lg[:, 0:2].reshape(gb, n, 2)                 # (Gb, N, 2)
    logits = jnp.swapaxes(logits, 1, 2)                   # (Gb, 2, N): N on lanes

    # --- per-graph softmax numerators over nodes (lane axis) ---
    mx = jnp.max(logits, axis=-1, keepdims=True)          # (Gb, 2, 1)
    p = jnp.exp(logits - mx)                              # (Gb, 2, N)
    # Denominator reciprocal on the EUP; only consumed after the fwd matmul.
    inv = pl.reciprocal(jnp.sum(p, axis=-1, keepdims=True), approx=True)

    # --- softmax-weighted node pooling on the MXU (unnormalised) ---
    # l2norm(g) is invariant to the positive 1/sum(exp) scale, so it is never
    # applied to g; for `new` it is folded in after the matmul.
    # TODO(synk): for very large N this pooling/softmax needs a second
    # "arbitrary" grid axis with running max/sum accumulators.
    g_un = jnp.einsum('gcn,gnd->gcd', p, e,
                      preferred_element_type=jnp.float32)  # (Gb, 2, D)
    g_mask = g_un[:, 0, :]                                 # (Gb, D)
    g_aug = g_un[:, 1, :]                                  # (Gb, D)

    # --- fwd_proj + deferred softmax normalisation ---
    wf = wf_ref[...]
    bf = bf_ref[...]
    new_mask = jnp.dot(g_mask, wf, preferred_element_type=jnp.float32) * inv[:, 0, :] + bf
    new_aug = jnp.dot(g_aug, wf, preferred_element_type=jnp.float32) * inv[:, 1, :] + bf

    def l2norm(x):
        # Matches `x / x.norm(dim=1, keepdim=True)` (no eps, like the module).
        return x * jax.lax.rsqrt(jnp.sum(x * x, axis=-1, keepdims=True))

    out_ref[0] = l2norm(g_mask) + l2norm(new_mask)        # mask_graph_emb rows
    out_ref[1] = l2norm(g_aug) + l2norm(new_aug)          # aug_graph_emb rows


def att_projwithgate(emb, params, graphs_per_step=GB_TARGET):
    """Returns (mask_graph_emb, aug_graph_emb), each (B, D)."""
    emb = jnp.asarray(emb, jnp.float32)
    # torch.squeeze analogue that can never eat the node/feature axes or drop
    # the batch axis when B == 1 or N == 1.
    n, d = emb.shape[-2], emb.shape[-1]
    assert d == D, f"feature dim must be {D}, got {d}"
    emb = emb.reshape(-1, n, d)
    b = emb.shape[0]

    # Graphs per grid step: a single step when B is small, else tiles of
    # graphs_per_step rounded to a multiple of 8 so the (2, Gb, D) output block
    # stays sublane-aligned.
    if b <= graphs_per_step:
        gb = b
        num_steps = 1
    else:
        gb = max(8, (graphs_per_step // 8) * 8)
        num_steps = -(-b // gb)
    # TODO(synk): on v7x pad num_steps to an even value for large B so both
    # TensorCores stay busy; skipped here to avoid wasted work at tiny B.
    b_pad = num_steps * gb
    if b_pad != b:
        # Pad with ones (not zeros) so padded graphs cannot produce NaNs.
        emb = jnp.concatenate(
            [emb, jnp.ones((b_pad - b, n, D), jnp.float32)], axis=0)

    # Fused per-node logit weight, (D, 128) so the MXU output stays lane-aligned:
    #   lane 0 -> mask-branch logits : emb @ gate_w^T @ att_w^T
    #   lane 1 -> aug-branch  logits : emb @ (I + gate_w^T) @ att_w^T
    # att_b and gate_b add the same constant to every node's logit of a graph;
    # the softmax over the node axis is shift-invariant, so they never enter
    # the kernel.  (Keep in sync if node masking/padding is ever added.)
    wa_col = params["att_w"].reshape(D, 1).astype(jnp.float32)
    gate_col = jnp.dot(params["gate_w"].T.astype(jnp.float32), wa_col,
                       precision=jax.lax.Precision.HIGHEST)
    wl = jnp.concatenate(
        [gate_col, wa_col + gate_col, jnp.zeros((D, 126), jnp.float32)], axis=1)

    wf = params["fwd_w"].T.astype(jnp.float32)             # (D, D)
    bf = params["fwd_b"].reshape(1, D).astype(jnp.float32)

    out = pl.pallas_call(
        _att_projwithgate_kernel,
        grid=(num_steps,),
        in_specs=[
            pl.BlockSpec((gb, n, D), lambda i: (i, 0, 0)),   # Gb graphs / step
            pl.BlockSpec((D, 128), lambda i: (0, 0)),        # fused logit W (resident)
            pl.BlockSpec((D, D), lambda i: (0, 0)),          # fwd_proj W^T (resident)
            pl.BlockSpec((1, D), lambda i: (0, 0)),          # fwd_proj bias (resident)
        ],
        out_specs=pl.BlockSpec((2, gb, D), lambda i: (0, i, 0)),
        out_shape=jax.ShapeDtypeStruct((2, b_pad, D), jnp.float32),
        compiler_params=pltpu.CompilerParams(
            dimension_semantics=("parallel",),
            vmem_limit_bytes=48 * 1024 * 1024),
    )(emb, wl, wf, bf)

    return out[0, :b], out[1, :b]


def reference(emb, params):
    """Plain-JAX transcription of the PyTorch forward for verification."""
    emb = jnp.squeeze(emb).astype(jnp.float32)
    mask_emb = emb @ params["gate_w"].T + params["gate_b"]
    aug_emb = emb + mask_emb

    def branch(x):
        gw = jnp.squeeze(x @ params["att_w"].T + params["att_b"], axis=-1)
        gw = jax.nn.softmax(gw, axis=-1)[..., None]
        g = jnp.sum(emb * gw, axis=1)
        new = g @ params["fwd_w"].T + params["fwd_b"]
        g = g / jnp.linalg.norm(g, axis=1, keepdims=True)
        new = new / jnp.linalg.norm(new, axis=1, keepdims=True)
        return g + new

    return branch(mask_emb), branch(aug_emb)


if __name__ == "__main__":
    key = jax.random.PRNGKey(0)
    k = jax.random.split(key, 7)
    bound = 1.0 / math.sqrt(D)   # torch default Linear init range

    params = {
        "gate_w": jax.random.uniform(k[0], (D, D), jnp.float32, -bound, bound),
        "gate_b": jax.random.uniform(k[1], (D,), jnp.float32, -bound, bound),
        "att_w": jax.random.uniform(k[2], (1, D), jnp.float32, -bound, bound),
        "att_b": jax.random.uniform(k[3], (1,), jnp.float32, -bound, bound),
        "fwd_w": jax.random.uniform(k[4], (D, D), jnp.float32, -bound, bound),
        "fwd_b": jax.random.uniform(k[5], (D,), jnp.float32, -bound, bound),
    }

    B, N = 2, 8
    emb = jax.random.normal(k[6], (B, N, D), jnp.float32)

    mask_out, aug_out = att_projwithgate(emb, params)
    jax.block_until_ready((mask_out, aug_out))

    ref_mask, ref_aug = reference(emb, params)
    np.testing.assert_allclose(np.asarray(mask_out), np.asarray(ref_mask),
                               atol=5e-4, rtol=5e-4)
    np.testing.assert_allclose(np.asarray(aug_out), np.asarray(ref_aug),
                               atol=5e-4, rtol=5e-4)
    print("KERNEL_OK")
</pallas_src>

<mosaic_0001>
module attributes {stable_mosaic.version = 11 : i64} {
  func.func @_att_projwithgate_kernel(%arg0: i32, %arg1: memref<2x8x384xf32, #tpu.memory_space<vmem>>, %arg2: memref<384x128xf32, #tpu.memory_space<vmem>>, %arg3: memref<384x384xf32, #tpu.memory_space<vmem>>, %arg4: memref<1x384xf32, #tpu.memory_space<vmem>>, %arg5: memref<2x2x384xf32, #tpu.memory_space<vmem>>) attributes {dimension_semantics = [#tpu.dimension_semantics<parallel>], iteration_bounds = array<i64: 1>, scalar_prefetch = 0 : i64, scratch_operands = 0 : i64, tpu.core_type = #tpu.core_type<tc>, window_params = [{transform_indices = @transform_0, window_bounds = array<i64: 2, 8, 384>}, {pipeline_mode = #tpu.pipeline_mode<synchronous>, transform_indices = @transform_1, window_bounds = array<i64: 384, 128>}, {pipeline_mode = #tpu.pipeline_mode<synchronous>, transform_indices = @transform_2, window_bounds = array<i64: 384, 384>}, {pipeline_mode = #tpu.pipeline_mode<synchronous>, transform_indices = @transform_3, window_bounds = array<i64: 1, 384>}, {transform_indices = @transform_4, window_bounds = array<i64: 2, 2, 384>}]} {
    %c0 = arith.constant 0 : index
    %c0_0 = arith.constant 0 : index
    %c0_1 = arith.constant 0 : index
    %0 = vector.load %arg1[%c0, %c0_0, %c0_1] : memref<2x8x384xf32, #tpu.memory_space<vmem>>, vector<2x8x384xf32>
    %1 = vector.shape_cast %0 : vector<2x8x384xf32> to vector<16x384xf32>
    %c0_2 = arith.constant 0 : index
    %c0_3 = arith.constant 0 : index
    %2 = vector.load %arg2[%c0_2, %c0_3] : memref<384x128xf32, #tpu.memory_space<vmem>>, vector<384x128xf32>
    %cst = arith.constant dense<0.000000e+00> : vector<16x128xf32>
    %3 = tpu.matmul %1, %2, %cst {dimension_numbers = #tpu.dot_dimension_numbers<[1], [0], [0], [1], [0, 0, 1, 1], [], []>} : vector<16x384xf32>, vector<384x128xf32>, vector<16x128xf32> -> vector<16x128xf32>
    %4 = vector.extract_strided_slice %3 {offsets = [0, 0], sizes = [16, 2], strides = [1, 1]} : vector<16x128xf32> to vector<16x2xf32>
    %5 = vector.shape_cast %4 : vector<16x2xf32> to vector<2x8x2xf32>
    %6 = tpu.transpose %5, [0, 2, 1] : vector<2x8x2xf32> -> vector<2x2x8xf32>
    %cst_4 = arith.constant dense<0xFF800000> : vector<2x2xf32>
    %7 = vector.multi_reduction <maximumf>, %6, %cst_4 [2] : vector<2x2x8xf32> to vector<2x2xf32>
    %8 = vector.shape_cast %7 : vector<2x2xf32> to vector<2x2x1xf32>
    %9 = vector.broadcast %8 : vector<2x2x1xf32> to vector<2x2x8xf32>
    %10 = arith.subf %6, %9 : vector<2x2x8xf32>
    %11 = math.exp %10 : vector<2x2x8xf32>
    %cst_5 = arith.constant dense<0.000000e+00> : vector<2x2xf32>
    %12 = vector.multi_reduction <add>, %11, %cst_5 [2] : vector<2x2x8xf32> to vector<2x2xf32>
    %13 = vector.shape_cast %12 : vector<2x2xf32> to vector<2x2x1xf32>
    %14 = tpu.reciprocal %13 {approx = true} : vector<2x2x1xf32> -> vector<2x2x1xf32>
    "tpu.trace_start"() <{level = 10 : i32, message = "gcn,gnd->gcd"}> : () -> ()
    %cst_6 = arith.constant dense<0.000000e+00> : vector<2x2x384xf32>
    %15 = tpu.matmul %11, %0, %cst_6 {dimension_numbers = #tpu.dot_dimension_numbers<[2], [1], [1], [2], [0, 0, 0, 1, 1, 2], [0], [0]>} : vector<2x2x8xf32>, vector<2x8x384xf32>, vector<2x2x384xf32> -> vector<2x2x384xf32>
    "tpu.trace_stop"() : () -> ()
    %16 = vector.extract_strided_slice %15 {offsets = [0, 0, 0], sizes = [2, 1, 384], strides = [1, 1, 1]} : vector<2x2x384xf32> to vector<2x1x384xf32>
    %17 = vector.shape_cast %16 : vector<2x1x384xf32> to vector<2x384xf32>
    %18 = vector.extract_strided_slice %15 {offsets = [0, 1, 0], sizes = [2, 1, 384], strides = [1, 1, 1]} : vector<2x2x384xf32> to vector<2x1x384xf32>
    %19 = vector.shape_cast %18 : vector<2x1x384xf32> to vector<2x384xf32>
    %c0_7 = arith.constant 0 : index
    %c0_8 = arith.constant 0 : index
    %20 = vector.load %arg3[%c0_7, %c0_8] : memref<384x384xf32, #tpu.memory_space<vmem>>, vector<384x384xf32>
    %c0_9 = arith.constant 0 : index
    %c0_10 = arith.constant 0 : index
    %21 = vector.load %arg4[%c0_9, %c0_10] : memref<1x384xf32, #tpu.memory_space<vmem>>, vector<1x384xf32>
    %cst_11 = arith.constant dense<0.000000e+00> : vector<2x384xf32>
    %22 = tpu.matmul %17, %20, %cst_11 {dimension_numbers = #tpu.dot_dimension_numbers<[1], [0], [0], [1], [0, 0, 1, 1], [], []>} : vector<2x384xf32>, vector<384x384xf32>, vector<2x384xf32> -> vector<2x384xf32>
    %23 = vector.extract_strided_slice %14 {offsets = [0, 0, 0], sizes = [2, 1, 1], strides = [1, 1, 1]} : vector<2x2x1xf32> to vector<2x1x1xf32>
    %24 = vector.shape_cast %23 : vector<2x1x1xf32> to vector<2x1xf32>
    %25 = vector.broadcast %24 : vector<2x1xf32> to vector<2x384xf32>
    %26 = arith.mulf %22, %25 : vector<2x384xf32>
    %27 = vector.broadcast %21 : vector<1x384xf32> to vector<2x384xf32>
    %28 = arith.addf %26, %27 : vector<2x384xf32>
    %cst_12 = arith.constant dense<0.000000e+00> : vector<2x384xf32>
    %29 = tpu.matmul %19, %20, %cst_12 {dimension_numbers = #tpu.dot_dimension_numbers<[1], [0], [0], [1], [0, 0, 1, 1], [], []>} : vector<2x384xf32>, vector<384x384xf32>, vector<2x384xf32> -> vector<2x384xf32>
    %30 = vector.extract_strided_slice %14 {offsets = [0, 1, 0], sizes = [2, 1, 1], strides = [1, 1, 1]} : vector<2x2x1xf32> to vector<2x1x1xf32>
    %31 = vector.shape_cast %30 : vector<2x1x1xf32> to vector<2x1xf32>
    %32 = vector.broadcast %31 : vector<2x1xf32> to vector<2x384xf32>
    %33 = arith.mulf %29, %32 : vector<2x384xf32>
    %34 = vector.broadcast %21 : vector<1x384xf32> to vector<2x384xf32>
    %35 = arith.addf %33, %34 : vector<2x384xf32>
    %36 = arith.mulf %17, %17 : vector<2x384xf32>
    %cst_13 = arith.constant dense<0.000000e+00> : vector<2xf32>
    %37 = vector.multi_reduction <add>, %36, %cst_13 [1] : vector<2x384xf32> to vector<2xf32>
    %38 = vector.shape_cast %37 : vector<2xf32> to vector<2x1xf32>
    %39 = math.rsqrt %38 : vector<2x1xf32>
    %40 = vector.broadcast %39 : vector<2x1xf32> to vector<2x384xf32>
    %41 = arith.mulf %17, %40 : vector<2x384xf32>
    %42 = arith.mulf %28, %28 : vector<2x384xf32>
    %cst_14 = arith.constant dense<0.000000e+00> : vector<2xf32>
    %43 = vector.multi_reduction <add>, %42, %cst_14 [1] : vector<2x384xf32> to vector<2xf32>
    %44 = vector.shape_cast %43 : vector<2xf32> to vector<2x1xf32>
    %45 = math.rsqrt %44 : vector<2x1xf32>
    %46 = vector.broadcast %45 : vector<2x1xf32> to vector<2x384xf32>
    %47 = arith.mulf %28, %46 : vector<2x384xf32>
    %48 = arith.addf %41, %47 : vector<2x384xf32>
    %c0_15 = arith.constant 0 : index
    %c0_16 = arith.constant 0 : index
    %c0_17 = arith.constant 0 : index
    %49 = vector.load %arg5[%c0_15, %c0_16, %c0_17] : memref<2x2x384xf32, #tpu.memory_space<vmem>>, vector<1x2x384xf32>
    %50 = vector.shape_cast %49 : vector<1x2x384xf32> to vector<2x384xf32>
    %51 = vector.shape_cast %48 : vector<2x384xf32> to vector<1x2x384xf32>
    tpu.vector_store %arg5[%c0_15, %c0_16, %c0_17], %51 {strides = array<i32>} : memref<2x2x384xf32, #tpu.memory_space<vmem>>, vector<1x2x384xf32>,
    %52 = arith.mulf %19, %19 : vector<2x384xf32>
    %cst_18 = arith.constant dense<0.000000e+00> : vector<2xf32>
    %53 = vector.multi_reduction <add>, %52, %cst_18 [1] : vector<2x384xf32> to vector<2xf32>
    %54 = vector.shape_cast %53 : vector<2xf32> to vector<2x1xf32>
    %55 = math.rsqrt %54 : vector<2x1xf32>
    %56 = vector.broadcast %55 : vector<2x1xf32> to vector<2x384xf32>
    %57 = arith.mulf %19, %56 : vector<2x384xf32>
    %58 = arith.mulf %35, %35 : vector<2x384xf32>
    %cst_19 = arith.constant dense<0.000000e+00> : vector<2xf32>
    %59 = vector.multi_reduction <add>, %58, %cst_19 [1] : vector<2x384xf32> to vector<2xf32>
    %60 = vector.shape_cast %59 : vector<2xf32> to vector<2x1xf32>
    %61 = math.rsqrt %60 : vector<2x1xf32>
    %62 = vector.broadcast %61 : vector<2x1xf32> to vector<2x384xf32>
    %63 = arith.mulf %35, %62 : vector<2x384xf32>
    %64 = arith.addf %57, %63 : vector<2x384xf32>
    %c1 = arith.constant 1 : index
    %c0_20 = arith.constant 0 : index
    %c0_21 = arith.constant 0 : index
    %65 = vector.load %arg5[%c1, %c0_20, %c0_21] : memref<2x2x384xf32, #tpu.memory_space<vmem>>, vector<1x2x384xf32>
    %66 = vector.shape_cast %65 : vector<1x2x384xf32> to vector<2x384xf32>
    %67 = vector.shape_cast %64 : vector<2x384xf32> to vector<1x2x384xf32>
    tpu.vector_store %arg5[%c1, %c0_20, %c0_21], %67 {strides = array<i32>} : memref<2x2x384xf32, #tpu.memory_space<vmem>>, vector<1x2x384xf32>,
    return
  }
  func.func @transform_0(%arg0: i32) -> (i32, i32, i32) {
    %c0_i32 = arith.constant 0 : i32
    %c0_i32_0 = arith.constant 0 : i32
    %c0_i32_1 = arith.constant 0 : i32
    return %arg0, %c0_i32, %c0_i32_0 : i32, i32, i32
  }
  func.func @transform_1(%arg0: i32) -> (i32, i32) {
    %c0_i32 = arith.constant 0 : i32
    %c0_i32_0 = arith.constant 0 : i32
    %c0_i32_1 = arith.constant 0 : i32
    return %c0_i32, %c0_i32_0 : i32, i32
  }
  func.func @transform_2(%arg0: i32) -> (i32, i32) {
    %c0_i32 = arith.constant 0 : i32
    %c0_i32_0 = arith.constant 0 : i32
    %c0_i32_1 = arith.constant 0 : i32
    return %c0_i32, %c0_i32_0 : i32, i32
  }
  func.func @transform_3(%arg0: i32) -> (i32, i32) {
    %c0_i32 = arith.constant 0 : i32
    %c0_i32_0 = arith.constant 0 : i32
    %c0_i32_1 = arith.constant 0 : i32
    return %c0_i32, %c0_i32_0 : i32, i32
  }
  func.func @transform_4(%arg0: i32) -> (i32, i32, i32) {
    %c0_i32 = arith.constant 0 : i32
    %c0_i32_0 = arith.constant 0 : i32
    %c0_i32_1 = arith.constant 0 : i32
    return %c0_i32, %arg0, %c0_i32_0 : i32, i32, i32
  }
}

</mosaic_0001>

<llo_original>
// kernel: tpu_custom_call.1
$region0: #{tpu_custom_call.1}
  #allocation0 [shape = 'u32[]', space=smem, size = 0x4, offset = 0x4, fixed_abs, tag = 'smem constant byte address 0x4 - core index']
  #allocation1 [shape = 'u32[144,128]{1,0:T(1,128)}', space=vmem, size = 0x12000, scoped, tag = 'internal scratch']
  %s0 = inlined_call_operand.hbm [shape: f32[2,8,384], index: 0, kind: input, shape index: {}]
  %s1 = inlined_call_operand.hbm [shape: f32[384,128], index: 1, kind: input, shape index: {}]
  %s2 = inlined_call_operand.hbm [shape: f32[384,384], index: 2, kind: input, shape index: {}]
  %s3 = inlined_call_operand.vmem [shape: f32[1,384], index: 3, kind: input, shape index: {}]
  %s4 = inlined_call_operand.hbm [shape: f32[2,2,384], index: 4, kind: output, shape index: {}]
  %s5 = sld [smem:[#allocation0]]
  $region38: #{tpu_custom_call.1} parent=0
    _
  %s7 = ssub.s32 1, %s5
  %s8 = scalar_select 0, %s7, %s5
  $region1: #{tpu_custom_call.1} parent=0
    #allocation2 [shape = 'u8[24576]{0}', space=vmem, size = 0x6000, scoped, tag = 'input window, operand 0, single buffered']
    #allocation3 [shape = 's32[1]{0}', space=sflag, size = 0x4, scoped, tag = 'scoped memory for tpu_custom_call.1']
    #allocation4 [shape = 's32[1]{0}', space=sflag, size = 0x4, scoped, tag = 'scoped memory for tpu_custom_call.1']
    #allocation5 [shape = 'u8[196608]{0}', space=vmem, size = 0x30000, scoped, tag = 'input window, operand 1, single buffered']
    #allocation6 [shape = 's32[1]{0}', space=sflag, size = 0x4, scoped, tag = 'scoped memory for tpu_custom_call.1']
    #allocation7 [shape = 'u8[589824]{0}', space=vmem, size = 0x90000, scoped, tag = 'input window, operand 2, single buffered']
    #allocation8 [shape = 'u8[6144]{0}', space=vmem, size = 0x1800, scoped, tag = 'output window, operand 0, single buffered']
    %9 = vsyncpa [#allocation3], 0
    %10 = vsyncpa [#allocation6], 0
    %11 = vsyncpa [#allocation4], 0
    // Predicated region
    $region2: #{tpu_custom_call.1} parent=1 // pred_check
      _
    $region3: #{tpu_custom_call.1} parent=1 // pred_check_branch
      %13 = sbr.rel (0) target = $region5
    $region4: #{tpu_custom_call.1} parent=1 // pred_region
      %s15 = ssub.s32 768, 768
      %16 = vsyncadd [#allocation3], %s15
      %s17 = sshll.u32 [#allocation2], 4
      %s18 = int_to_ptr.vmem [resolvable:$true] %s17
      %23 = dma.hbm_to_vmem [thread:$0]  %s0, 768, %s18, [#allocation3], 384, 384, 24
    $region5: #{tpu_custom_call.1} parent=1 // pred_fallthru
      _
    // Predicated region
    $region6: #{tpu_custom_call.1} parent=1 // pred_check
      _
    $region7: #{tpu_custom_call.1} parent=1 // pred_check_branch
      %25 = sbr.rel (0) target = $region9
    $region8: #{tpu_custom_call.1} parent=1 // pred_region
      %s27 = ssub.s32 6144, 6144
      %28 = vsyncadd [#allocation6], %s27
      %s29 = sshll.u32 [#allocation5], 4
      %s30 = int_to_ptr.vmem [resolvable:$true] %s29
      %35 = dma.hbm_to_vmem [thread:$0]  %s1, 6144, %s30, [#allocation6], 128, 128, 8
    $region9: #{tpu_custom_call.1} parent=1 // pred_fallthru
      _
    // Predicated region
    $region10: #{tpu_custom_call.1} parent=1 // pred_check
      _
    $region11: #{tpu_custom_call.1} parent=1 // pred_check_branch
      %37 = sbr.rel (0) target = $region13
    $region12: #{tpu_custom_call.1} parent=1 // pred_region
      %s39 = ssub.s32 18432, 18432
      %40 = vsyncadd [#allocation6], %s39
      %s41 = sshll.u32 [#allocation7], 4
      %s42 = int_to_ptr.vmem [resolvable:$true] %s41
      %47 = dma.hbm_to_vmem [thread:$0]  %s2, 18432, %s42, [#allocation6], 384, 384, 24
    $region13: #{tpu_custom_call.1} parent=1 // pred_fallthru
      _
    // Predicated region
    $region14: #{tpu_custom_call.1} parent=1 // pred_check
      _
    $region15: #{tpu_custom_call.1} parent=1 // pred_check_branch
      %49 = sbr.rel (0) target = $region17
    $region16: #{tpu_custom_call.1} parent=1 // pred_region
      _
    $region17: #{tpu_custom_call.1} parent=1 // pred_fallthru
      _
    // Predicated region
    $region18: #{tpu_custom_call.1} parent=1 // pred_check
      _
    $region19: #{tpu_custom_call.1} parent=1 // pred_check_branch
      %51 = sbr.rel (0) target = $region21
    $region20: #{tpu_custom_call.1} parent=1 // pred_region
      %52 = dma.done [#allocation3], 768
    $region21: #{tpu_custom_call.1} parent=1 // pred_fallthru
      _
    // Predicated region
    $region22: #{tpu_custom_call.1} parent=1 // pred_check
      _
    $region23: #{tpu_custom_call.1} parent=1 // pred_check_branch
      %54 = sbr.rel (0) target = $region25
    $region24: #{tpu_custom_call.1} parent=1 // pred_region
      %55 = dma.done [#allocation6], 6144
    $region25: #{tpu_custom_call.1} parent=1 // pred_fallthru
      _
    // Predicated region
    $region26: #{tpu_custom_call.1} parent=1 // pred_check
      _
    $region27: #{tpu_custom_call.1} parent=1 // pred_check_branch
      %57 = sbr.rel (0) target = $region29
    $region28: #{tpu_custom_call.1} parent=1 // pred_region
      %58 = dma.done [#allocation6], 18432
    $region29: #{tpu_custom_call.1} parent=1 // pred_fallthru
      _
    %v59 = vld [vmem:[#allocation2] sm:$0xff]
    %v60 = vld [vmem:[#allocation2 + $0x8] sm:$0xff]
    %v61 = vld [vmem:[#allocation2 + $0x10] sm:$0xff]
    %v62 = vld [vmem:[#allocation2 + $0x18] sm:$0xff]
    %v63 = vld [vmem:[#allocation2 + $0x20] sm:$0xff]
    %v64 = vld [vmem:[#allocation2 + $0x28] sm:$0xff]
    %v65 = vld [vmem:[#allocation5] sm:$0xff]
    %v66 = vld [vmem:[#allocation5 + $0x8] sm:$0xff]
    %v67 = vld [vmem:[#allocation5 + $0x10] sm:$0xff]
    %v68 = vld [vmem:[#allocation5 + $0x18] sm:$0xff]
    %v69 = vld [vmem:[#allocation5 + $0x20] sm:$0xff]
    %v70 = vld [vmem:[#allocation5 + $0x28] sm:$0xff]
    %v71 = vld [vmem:[#allocation5 + $0x30] sm:$0xff]
    %v72 = vld [vmem:[#allocation5 + $0x38] sm:$0xff]
    %v73 = vld [vmem:[#allocation5 + $0x40] sm:$0xff]
    %v74 = vld [vmem:[#allocation5 + $0x48] sm:$0xff]
    %v75 = vld [vmem:[#allocation5 + $0x50] sm:$0xff]
    %v76 = vld [vmem:[#allocation5 + $0x58] sm:$0xff]
    %v77 = vld [vmem:[#allocation5 + $0x60] sm:$0xff]
    %v78 = vld [vmem:[#allocation5 + $0x68] sm:$0xff]
    %v79 = vld [vmem:[#allocation5 + $0x70] sm:$0xff]
    %v80 = vld [vmem:[#allocation5 + $0x78] sm:$0xff]
    %v81 = vld [vmem:[#allocation5 + $0x80] sm:$0xff]
    %v82 = vld [vmem:[#allocation5 + $0x88] sm:$0xff]
    %v83 = vld [vmem:[#allocation5 + $0x90] sm:$0xff]
    %v84 = vld [vmem:[#allocation5 + $0x98] sm:$0xff]
    %v85 = vld [vmem:[#allocation5 + $0xa0] sm:$0xff]
    %v86 = vld [vmem:[#allocation5 + $0xa8] sm:$0xff]
    %v87 = vld [vmem:[#allocation5 + $0xb0] sm:$0xff]
    %v88 = vld [vmem:[#allocation5 + $0xb8] sm:$0xff]
    %v89 = vld [vmem:[#allocation5 + $0xc0] sm:$0xff]
    %v90 = vld [vmem:[#allocation5 + $0xc8] sm:$0xff]
    %v91 = vld [vmem:[#allocation5 + $0xd0] sm:$0xff]
    %v92 = vld [vmem:[#allocation5 + $0xd8] sm:$0xff]
    %v93 = vld [vmem:[#allocation5 + $0xe0] sm:$0xff]
    %v94 = vld [vmem:[#allocation5 + $0xe8] sm:$0xff]
    %v95 = vld [vmem:[#allocation5 + $0xf0] sm:$0xff]
    %v96 = vld [vmem:[#allocation5 + $0xf8] sm:$0xff]
    %v97 = vld [vmem:[#allocation5 + $0x100] sm:$0xff]
    %v98 = vld [vmem:[#allocation5 + $0x108] sm:$0xff]
    %v99 = vld [vmem:[#allocation5 + $0x110] sm:$0xff]
    %v100 = vld [vmem:[#allocation5 + $0x118] sm:$0xff]
    %v101 = vld [vmem:[#allocation5 + $0x120] sm:$0xff]
    %v102 = vld [vmem:[#allocation5 + $0x128] sm:$0xff]
    %v103 = vld [vmem:[#allocation5 + $0x130] sm:$0xff]
    %v104 = vld [vmem:[#allocation5 + $0x138] sm:$0xff]
    %v105 = vld [vmem:[#allocation5 + $0x140] sm:$0xff]
    %v106 = vld [vmem:[#allocation5 + $0x148] sm:$0xff]
    %v107 = vld [vmem:[#allocation5 + $0x150] sm:$0xff]
    %v108 = vld [vmem:[#allocation5 + $0x158] sm:$0xff]
    %v109 = vld [vmem:[#allocation5 + $0x160] sm:$0xff]
    %v110 = vld [vmem:[#allocation5 + $0x168] sm:$0xff]
    %v111 = vld [vmem:[#allocation5 + $0x170] sm:$0xff]
    %v112 = vld [vmem:[#allocation5 + $0x178] sm:$0xff]
    %113 = vmatprep.subr.mxu0 0.0
    %114 = vmatpush1.msra.mxu0 %v65
    %115 = vmatprep.subr.mxu0 0.0
    %116 = vmatpush1.msra.mxu0 %v66
    %117 = vmatprep.subr.mxu0 0.0
    %118 = vmatpush1.msra.mxu0 %v67
    %119 = vmatprep.subr.mxu0 0.0
    %120 = vmatpush1.msra.mxu0 %v68
    %121 = vmatprep.subr.mxu0 0.0
    %122 = vmatpush1.msra.mxu0 %v69
    %123 = vmatprep.subr.mxu0 0.0
    %124 = vmatpush1.msra.mxu0 %v70
    %125 = vmatprep.subr.mxu0 0.0
    %126 = vmatpush1.msra.mxu0 %v71
    %127 = vmatprep.subr.mxu0 0.0
    %128 = vmatpush1.msra.mxu0 %v72
    %129 = vmatprep.subr.mxu0 0.0
    %130 = vmatpush1.msra.mxu0 %v73
    %131 = vmatprep.subr.mxu0 0.0
    %132 = vmatpush1.msra.mxu0 %v74
    %133 = vmatprep.subr.mxu0 0.0
    %134 = vmatpush1.msra.mxu0 %v75
    %135 = vmatprep.subr.mxu0 0.0
    %136 = vmatpush1.msra.mxu0 %v76
    %137 = vmatprep.subr.mxu0 0.0
    %138 = vmatpush1.msra.mxu0 %v77
    %139 = vmatprep.subr.mxu0 0.0
    %140 = vmatpush1.msra.mxu0 %v78
    %141 = vmatprep.subr.mxu0 0.0
    %142 = vmatpush1.msra.mxu0 %v79
    %143 = vmatprep.subr.mxu0 0.0
    %144 = vmatpush1.msra.mxu0 %v80
    %145 = vmatprep.subr.mxu0 0.0
    %146 = vmatpush1.msra.mxu0 %v81
    %147 = vmatprep.subr.mxu0 0.0
    %148 = vmatpush1.msra.mxu0 %v82
    %149 = vmatprep.subr.mxu0 0.0
    %150 = vmatpush1.msra.mxu0 %v83
    %151 = vmatprep.subr.mxu0 0.0
    %152 = vmatpush1.msra.mxu0 %v84
    %153 = vmatprep.subr.mxu0 0.0
    %154 = vmatpush1.msra.mxu0 %v85
    %155 = vmatprep.subr.mxu0 0.0
    %156 = vmatpush1.msra.mxu0 %v86
    %157 = vmatprep.subr.mxu0 0.0
    %158 = vmatpush1.msra.mxu0 %v87
    %159 = vmatprep.subr.mxu0 0.0
    %160 = vmatpush1.msra.mxu0 %v88
    %161 = vmatprep.subr.mxu0 0.0
    %162 = vmatpush1.msra.mxu0 %v89
    %163 = vmatprep.subr.mxu0 0.0
    %164 = vmatpush1.msra.mxu0 %v90
    %165 = vmatprep.subr.mxu0 0.0
    %166 = vmatpush1.msra.mxu0 %v91
    %167 = vmatprep.subr.mxu0 0.0
    %168 = vmatpush1.msra.mxu0 %v92
    %169 = vmatprep.subr.mxu0 0.0
    %170 = vmatpush1.msra.mxu0 %v93
    %171 = vmatprep.subr.mxu0 0.0
    %172 = vmatpush1.msra.mxu0 %v94
    %173 = vmatprep.subr.mxu0 0.0
    %174 = vmatpush1.msra.mxu0 %v95
    %175 = vmatprep.subr.mxu0 0.0
    %176 = vmatpush1.msra.mxu0 %v96
    %177 = vmatprep.mubr.f32.mxu0 %v60
    %178 = vmatmul.mubr.f32.gmra.mrb[0].mxu0 %v59
    %v179 = vpop.f32.mrb[0].mxu0
    %v180 = vadd.f32 0.0, %v179
    %v181 = vpop.f32.mrb[0].mxu0
    %182 = vmatprep.mubr.f32.mxu0 %v63
    %183 = vmatmul.mubr.f32.gmra.mrb[0].mxu0 %v62
    %v184 = vpop.f32.mrb[0].mxu0
    %v185 = vadd.f32 0.0, %v184
    %v186 = vpop.f32.mrb[0].mxu0
    %187 = vdwg.mxu0
    %188 = vmatprep.subr.mxu0 0.0
    %189 = vmatpush1.msra.mxu0 %v97
    %190 = vmatprep.subr.mxu0 0.0
    %191 = vmatpush1.msra.mxu0 %v98
    %192 = vmatprep.subr.mxu0 0.0
    %193 = vmatpush1.msra.mxu0 %v99
    %194 = vmatprep.subr.mxu0 0.0
    %195 = vmatpush1.msra.mxu0 %v100
    %196 = vmatprep.subr.mxu0 0.0
    %197 = vmatpush1.msra.mxu0 %v101
    %198 = vmatprep.subr.mxu0 0.0
    %199 = vmatpush1.msra.mxu0 %v102
    %200 = vmatprep.subr.mxu0 0.0
    %201 = vmatpush1.msra.mxu0 %v103
    %202 = vmatprep.subr.mxu0 0.0
    %203 = vmatpush1.msra.mxu0 %v104
    %204 = vmatprep.subr.mxu0 0.0
    %205 = vmatpush1.msra.mxu0 %v105
    %206 = vmatprep.subr.mxu0 0.0
    %207 = vmatpush1.msra.mxu0 %v106
    %208 = vmatprep.subr.mxu0 0.0
    %209 = vmatpush1.msra.mxu0 %v107
    %210 = vmatprep.subr.mxu0 0.0
    %211 = vmatpush1.msra.mxu0 %v108
    %212 = vmatprep.subr.mxu0 0.0
    %213 = vmatpush1.msra.mxu0 %v109
    %214 = vmatprep.subr.mxu0 0.0
    %215 = vmatpush1.msra.mxu0 %v110
    %216 = vmatprep.subr.mxu0 0.0
    %217 = vmatpush1.msra.mxu0 %v111
    %218 = vmatprep.subr.mxu0 0.0
    %219 = vmatpush1.msra.mxu0 %v112
    %220 = vmatprep.subr.mxu0 0.0
    %221 = vmatpush1.msra.mxu0 0.0
    %222 = vmatprep.subr.mxu0 0.0
    %223 = vmatpush1.msra.mxu0 0.0
    %224 = vmatprep.subr.mxu0 0.0
    %225 = vmatpush1.msra.mxu0 0.0
    %226 = vmatprep.subr.mxu0 0.0
    %227 = vmatpush1.msra.mxu0 0.0
    %228 = vmatprep.subr.mxu0 0.0
    %229 = vmatpush1.msra.mxu0 0.0
    %230 = vmatprep.subr.mxu0 0.0
    %231 = vmatpush1.msra.mxu0 0.0
    %232 = vmatprep.subr.mxu0 0.0
    %233 = vmatpush1.msra.mxu0 0.0
    %234 = vmatprep.subr.mxu0 0.0
    %235 = vmatpush1.msra.mxu0 0.0
    %236 = vmatprep.subr.mxu0 0.0
    %237 = vmatpush1.msra.mxu0 0.0
    %238 = vmatprep.subr.mxu0 0.0
    %239 = vmatpush1.msra.mxu0 0.0
    %240 = vmatprep.subr.mxu0 0.0
    %241 = vmatpush1.msra.mxu0 0.0
    %242 = vmatprep.subr.mxu0 0.0
    %243 = vmatpush1.msra.mxu0 0.0
    %244 = vmatprep.subr.mxu0 0.0
    %245 = vmatpush1.msra.mxu0 0.0
    %246 = vmatprep.subr.mxu0 0.0
    %247 = vmatpush1.msra.mxu0 0.0
    %248 = vmatprep.subr.mxu0 0.0
    %249 = vmatpush1.msra.mxu0 0.0
    %250 = vmatprep.subr.mxu0 0.0
    %251 = vmatpush1.msra.mxu0 0.0
    %252 = vmatprep.mubr.f32.mxu0 0.0
    %253 = vmatmul.mubr.f32.gmra.mrb[0].mxu0 %v61
    %v254 = vpop.f32.mrb[0].mxu0
    %v255 = vadd.f32 %v180, %v254
    %v256 = vpop.f32.mrb[0].mxu0
    %257 = vmatprep.mubr.f32.mxu0 0.0
    %258 = vmatmul.mubr.f32.gmra.mrb[0].mxu0 %v64
    %v259 = vpop.f32.mrb[0].mxu0
    %v260 = vadd.f32 %v185, %v259
    %v261 = vpop.f32.mrb[0].mxu0
    %262 = vdwg.mxu0
    %263 = vxpose.xlu0.b32.start [1/16] %v255, 128
    %264 = vxpose.xlu0.b32.cont [2/16] 0.0, 128
    %265 = vxpose.xlu0.b32.cont [3/16] 0.0, 128
    %266 = vxpose.xlu0.b32.cont [4/16] 0.0, 128
    %267 = vxpose.xlu0.b32.cont [5/16] 0.0, 128
    %268 = vxpose.xlu0.b32.cont [6/16] 0.0, 128
    %269 = vxpose.xlu0.b32.cont [7/16] 0.0, 128
    %270 = vxpose.xlu0.b32.cont [8/16] 0.0, 128
    %271 = vxpose.xlu0.b32.cont [9/16] 0.0, 128
    %272 = vxpose.xlu0.b32.cont [10/16] 0.0, 128
    %273 = vxpose.xlu0.b32.cont [11/16] 0.0, 128
    %274 = vxpose.xlu0.b32.cont [12/16] 0.0, 128
    %275 = vxpose.xlu0.b32.cont [13/16] 0.0, 128
    %276 = vxpose.xlu0.b32.cont [14/16] 0.0, 128
    %277 = vxpose.xlu0.b32.cont [15/16] 0.0, 128
    %278 = vxpose.xlu0.b32.end [16/16] 0.0, 128
    %v279 = vpop.trf.xlu0
    %v280 = vpop.trf.xlu0
    %v281 = vpop.trf.xlu0
    %v282 = vpop.trf.xlu0
    %v283 = vpop.trf.xlu0
    %v284 = vpop.trf.xlu0
    %v285 = vpop.trf.xlu0
    %v286 = vpop.trf.xlu0
    %v287 = vpop.trf.xlu0
    %v288 = vpop.trf.xlu0
    %v289 = vpop.trf.xlu0
    %v290 = vpop.trf.xlu0
    %v291 = vpop.trf.xlu0
    %v292 = vpop.trf.xlu0
    %v293 = vpop.trf.xlu0
    %v294 = vpop.trf.xlu0
    %295 = vxpose.xlu0.b32.start [1/16] %v260, 128
    %296 = vxpose.xlu0.b32.cont [2/16] 0.0, 128
    %297 = vxpose.xlu0.b32.cont [3/16] 0.0, 128
    %298 = vxpose.xlu0.b32.cont [4/16] 0.0, 128
    %299 = vxpose.xlu0.b32.cont [5/16] 0.0, 128
    %300 = vxpose.xlu0.b32.cont [6/16] 0.0, 128
    %301 = vxpose.xlu0.b32.cont [7/16] 0.0, 128
    %302 = vxpose.xlu0.b32.cont [8/16] 0.0, 128
    %303 = vxpose.xlu0.b32.cont [9/16] 0.0, 128
    %304 = vxpose.xlu0.b32.cont [10/16] 0.0, 128
    %305 = vxpose.xlu0.b32.cont [11/16] 0.0, 128
    %306 = vxpose.xlu0.b32.cont [12/16] 0.0, 128
    %307 = vxpose.xlu0.b32.cont [13/16] 0.0, 128
    %308 = vxpose.xlu0.b32.cont [14/16] 0.0, 128
    %309 = vxpose.xlu0.b32.cont [15/16] 0.0, 128
    %310 = vxpose.xlu0.b32.end [16/16] 0.0, 128
    %v311 = vpop.trf.xlu0
    %v312 = vpop.trf.xlu0
    %v313 = vpop.trf.xlu0
    %v314 = vpop.trf.xlu0
    %v315 = vpop.trf.xlu0
    %v316 = vpop.trf.xlu0
    %v317 = vpop.trf.xlu0
    %v318 = vpop.trf.xlu0
    %v319 = vpop.trf.xlu0
    %v320 = vpop.trf.xlu0
    %v321 = vpop.trf.xlu0
    %v322 = vpop.trf.xlu0
    %v323 = vpop.trf.xlu0
    %v324 = vpop.trf.xlu0
    %v325 = vpop.trf.xlu0
    %v326 = vpop.trf.xlu0
    %vm327 = vcmask 58368
    %v328 = vsel %vm327, %v279, -inf
    %329 = vmax.xlane.f32.xlu0 %v328
    %v330 = vpop.xlane.xlu0 %329
    %v331 = vsel %vm327, %v311, -inf
    %332 = vmax.xlane.f32.xlu0 %v331
    %v333 = vpop.xlane.xlu0 %332
    %v334 = vsub.f32 %v279, %v330
    %v335 = vsub.f32 %v311, %v333
    %v336 = vmul.f32 %v334, 1.442695
    %v337 = vpow.pop %v336
    %v338 = vmul.f32 %v335, 1.442695
    %v339 = vpow.pop %v338
    %v340 = vsel %vm327, %v337, 0.0
    %341 = vadd.xlane.f32.xlu0 %v340
    %v342 = vpop.xlane.xlu0 %341
    %v343 = vsel %vm327, %v339, 0.0
    %344 = vadd.xlane.f32.xlu0 %v343
    %v345 = vpop.xlane.xlu0 %344
    %v346 = vrcp.pop %v342
    %v347 = vrcp.pop %v345
    %vm348 = vcmask 64512
    %v350 = vsel %vm348, %v337, 0
    %352 = vmatprep.subr.mxu0 %v60
    %353 = vmatpush1.msra.mxu0 %v59
    %354 = vmatprep.subr.mxu0 0.0
    %355 = vmatpush1.msra.mxu0 0.0
    %356 = vmatprep.subr.mxu0 0.0
    %357 = vmatpush1.msra.mxu0 0.0
    %358 = vmatprep.subr.mxu0 0.0
    %359 = vmatpush1.msra.mxu0 0.0
    %360 = vmatprep.subr.mxu0 0.0
    %361 = vmatpush1.msra.mxu0 0.0
    %362 = vmatprep.subr.mxu0 0.0
    %363 = vmatpush1.msra.mxu0 0.0
    %364 = vmatprep.subr.mxu0 0.0
    %365 = vmatpush1.msra.mxu0 0.0
    %366 = vmatprep.subr.mxu0 0.0
    %367 = vmatpush1.msra.mxu0 0.0
    %368 = vmatprep.subr.mxu0 0.0
    %369 = vmatpush1.msra.mxu0 0.0
    %370 = vmatprep.subr.mxu0 0.0
    %371 = vmatpush1.msra.mxu0 0.0
    %372 = vmatprep.subr.mxu0 0.0
    %373 = vmatpush1.msra.mxu0 0.0
    %374 = vmatprep.subr.mxu0 0.0
    %375 = vmatpush1.msra.mxu0 0.0
    %376 = vmatprep.subr.mxu0 0.0
    %377 = vmatpush1.msra.mxu0 0.0
    %378 = vmatprep.subr.mxu0 0.0
    %379 = vmatpush1.msra.mxu0 0.0
    %380 = vmatprep.subr.mxu0 0.0
    %381 = vmatpush1.msra.mxu0 0.0
    %382 = vmatprep.subr.mxu0 0.0
    %383 = vmatpush1.msra.mxu0 0.0
    %384 = vmatprep.subr.mxu0 0.0
    %385 = vmatpush1.msra.mxu0 0.0
    %386 = vmatprep.subr.mxu0 0.0
    %387 = vmatpush1.msra.mxu0 0.0
    %388 = vmatprep.subr.mxu0 0.0
    %389 = vmatpush1.msra.mxu0 0.0
    %390 = vmatprep.subr.mxu0 0.0
    %391 = vmatpush1.msra.mxu0 0.0
    %392 = vmatprep.subr.mxu0 0.0
    %393 = vmatpush1.msra.mxu0 0.0
    %394 = vmatprep.subr.mxu0 0.0
    %395 = vmatpush1.msra.mxu0 0.0
    %396 = vmatprep.subr.mxu0 0.0
    %397 = vmatpush1.msra.mxu0 0.0
    %398 = vmatprep.subr.mxu0 0.0
    %399 = vmatpush1.msra.mxu0 0.0
    %400 = vmatprep.subr.mxu0 0.0
    %401 = vmatpush1.msra.mxu0 0.0
    %402 = vmatprep.subr.mxu0 0.0
    %403 = vmatpush1.msra.mxu0 0.0
    %404 = vmatprep.subr.mxu0 0.0
    %405 = vmatpush1.msra.mxu0 0.0
    %406 = vmatprep.subr.mxu0 0.0
    %407 = vmatpush1.msra.mxu0 0.0
    %408 = vmatprep.subr.mxu0 0.0
    %409 = vmatpush1.msra.mxu0 0.0
    %410 = vmatprep.subr.mxu0 0.0
    %411 = vmatpush1.msra.mxu0 0.0
    %412 = vmatprep.subr.mxu0 0.0
    %413 = vmatpush1.msra.mxu0 0.0
    %414 = vmatprep.subr.mxu0 0.0
    %415 = vmatpush1.msra.mxu0 0.0
    %416 = vmatprep.mubr.f32.mxu0 0.0
    %417 = vmatmul.mubr.f32.gmra.mrb[0].mxu0 %v350
    %v418 = vpop.f32.mrb[0].mxu0
    %v419 = vadd.f32 0.0, %v418
    %v420 = vpop.f32.mrb[0].mxu0
    %v421 = vadd.f32 0.0, %v420
    %422 = vdwg.mxu0
    %423 = vmatprep.subr.mxu0 0.0
    %424 = vmatpush1.msra.mxu0 %v61
    %425 = vmatprep.subr.mxu0 0.0
    %426 = vmatpush1.msra.mxu0 0.0
    %427 = vmatprep.subr.mxu0 0.0
    %428 = vmatpush1.msra.mxu0 0.0
    %429 = vmatprep.subr.mxu0 0.0
    %430 = vmatpush1.msra.mxu0 0.0
    %431 = vmatprep.subr.mxu0 0.0
    %432 = vmatpush1.msra.mxu0 0.0
    %433 = vmatprep.subr.mxu0 0.0
    %434 = vmatpush1.msra.mxu0 0.0
    %435 = vmatprep.subr.mxu0 0.0
    %436 = vmatpush1.msra.mxu0 0.0
    %437 = vmatprep.subr.mxu0 0.0
    %438 = vmatpush1.msra.mxu0 0.0
    %439 = vmatprep.subr.mxu0 0.0
    %440 = vmatpush1.msra.mxu0 0.0
    %441 = vmatprep.subr.mxu0 0.0
    %442 = vmatpush1.msra.mxu0 0.0
    %443 = vmatprep.subr.mxu0 0.0
    %444 = vmatpush1.msra.mxu0 0.0
    %445 = vmatprep.subr.mxu0 0.0
    %446 = vmatpush1.msra.mxu0 0.0
    %447 = vmatprep.subr.mxu0 0.0
    %448 = vmatpush1.msra.mxu0 0.0
    %449 = vmatprep.subr.mxu0 0.0
    %450 = vmatpush1.msra.mxu0 0.0
    %451 = vmatprep.subr.mxu0 0.0
    %452 = vmatpush1.msra.mxu0 0.0
    %453 = vmatprep.subr.mxu0 0.0
    %454 = vmatpush1.msra.mxu0 0.0
    %455 = vmatprep.subr.mxu0 0.0
    %456 = vmatpush1.msra.mxu0 0.0
    %457 = vmatprep.subr.mxu0 0.0
    %458 = vmatpush1.msra.mxu0 0.0
    %459 = vmatprep.subr.mxu0 0.0
    %460 = vmatpush1.msra.mxu0 0.0
    %461 = vmatprep.subr.mxu0 0.0
    %462 = vmatpush1.msra.mxu0 0.0
    %463 = vmatprep.subr.mxu0 0.0
    %464 = vmatpush1.msra.mxu0 0.0
    %465 = vmatprep.subr.mxu0 0.0
    %466 = vmatpush1.msra.mxu0 0.0
    %467 = vmatprep.subr.mxu0 0.0
    %468 = vmatpush1.msra.mxu0 0.0
    %469 = vmatprep.subr.mxu0 0.0
    %470 = vmatpush1.msra.mxu0 0.0
    %471 = vmatprep.subr.mxu0 0.0
    %472 = vmatpush1.msra.mxu0 0.0
    %473 = vmatprep.subr.mxu0 0.0
    %474 = vmatpush1.msra.mxu0 0.0
    %475 = vmatprep.subr.mxu0 0.0
    %476 = vmatpush1.msra.mxu0 0.0
    %477 = vmatprep.subr.mxu0 0.0
    %478 = vmatpush1.msra.mxu0 0.0
    %479 = vmatprep.subr.mxu0 0.0
    %480 = vmatpush1.msra.mxu0 0.0
    %481 = vmatprep.subr.mxu0 0.0
    %482 = vmatpush1.msra.mxu0 0.0
    %483 = vmatprep.subr.mxu0 0.0
    %484 = vmatpush1.msra.mxu0 0.0
    %485 = vmatprep.subr.mxu0 0.0
    %486 = vmatpush1.msra.mxu0 0.0
    %487 = vmatprep.mubr.f32.mxu0 0.0
    %488 = vmatmul.mubr.f32.gmra.mrb[0].mxu0 %v350
    %v489 = vpop.f32.mrb[0].mxu0
    %v490 = vadd.f32 0.0, %v489
    %v491 = vpop.f32.mrb[0].mxu0
    %492 = vdwg.mxu0
    %v494 = vsel %vm348, %v339, 0
    %496 = vmatprep.subr.mxu0 %v63
    %497 = vmatpush1.msra.mxu0 %v62
    %498 = vmatprep.subr.mxu0 0.0
    %499 = vmatpush1.msra.mxu0 0.0
    %500 = vmatprep.subr.mxu0 0.0
    %501 = vmatpush1.msra.mxu0 0.0
    %502 = vmatprep.subr.mxu0 0.0
    %503 = vmatpush1.msra.mxu0 0.0
    %504 = vmatprep.subr.mxu0 0.0
    %505 = vmatpush1.msra.mxu0 0.0
    %506 = vmatprep.subr.mxu0 0.0
    %507 = vmatpush1.msra.mxu0 0.0
    %508 = vmatprep.subr.mxu0 0.0
    %509 = vmatpush1.msra.mxu0 0.0
    %510 = vmatprep.subr.mxu0 0.0
    %511 = vmatpush1.msra.mxu0 0.0
    %512 = vmatprep.subr.mxu0 0.0
    %513 = vmatpush1.msra.mxu0 0.0
    %514 = vmatprep.subr.mxu0 0.0
    %515 = vmatpush1.msra.mxu0 0.0
    %516 = vmatprep.subr.mxu0 0.0
    %517 = vmatpush1.msra.mxu0 0.0
    %518 = vmatprep.subr.mxu0 0.0
    %519 = vmatpush1.msra.mxu0 0.0
    %520 = vmatprep.subr.mxu0 0.0
    %521 = vmatpush1.msra.mxu0 0.0
    %522 = vmatprep.subr.mxu0 0.0
    %523 = vmatpush1.msra.mxu0 0.0
    %524 = vmatprep.subr.mxu0 0.0
    %525 = vmatpush1.msra.mxu0 0.0
    %526 = vmatprep.subr.mxu0 0.0
    %527 = vmatpush1.msra.mxu0 0.0
    %528 = vmatprep.subr.mxu0 0.0
    %529 = vmatpush1.msra.mxu0 0.0
    %530 = vmatprep.subr.mxu0 0.0
    %531 = vmatpush1.msra.mxu0 0.0
    %532 = vmatprep.subr.mxu0 0.0
    %533 = vmatpush1.msra.mxu0 0.0
    %534 = vmatprep.subr.mxu0 0.0
    %535 = vmatpush1.msra.mxu0 0.0
    %536 = vmatprep.subr.mxu0 0.0
    %537 = vmatpush1.msra.mxu0 0.0
    %538 = vmatprep.subr.mxu0 0.0
    %539 = vmatpush1.msra.mxu0 0.0
    %540 = vmatprep.subr.mxu0 0.0
    %541 = vmatpush1.msra.mxu0 0.0
    %542 = vmatprep.subr.mxu0 0.0
    %543 = vmatpush1.msra.mxu0 0.0
    %544 = vmatprep.subr.mxu0 0.0
    %545 = vmatpush1.msra.mxu0 0.0
    %546 = vmatprep.subr.mxu0 0.0
    %547 = vmatpush1.msra.mxu0 0.0
    %548 = vmatprep.subr.mxu0 0.0
    %549 = vmatpush1.msra.mxu0 0.0
    %550 = vmatprep.subr.mxu0 0.0
    %551 = vmatpush1.msra.mxu0 0.0
    %552 = vmatprep.subr.mxu0 0.0
    %553 = vmatpush1.msra.mxu0 0.0
    %554 = vmatprep.subr.mxu0 0.0
    %555 = vmatpush1.msra.mxu0 0.0
    %556 = vmatprep.subr.mxu0 0.0
    %557 = vmatpush1.msra.mxu0 0.0
    %558 = vmatprep.subr.mxu0 0.0
    %559 = vmatpush1.msra.mxu0 0.0
    %560 = vmatprep.mubr.f32.mxu0 0.0
    %561 = vmatmul.mubr.f32.gmra.mrb[0].mxu0 %v494
    %v562 = vpop.f32.mrb[0].mxu0
    %v563 = vadd.f32 0.0, %v562
    %v564 = vpop.f32.mrb[0].mxu0
    %v565 = vadd.f32 0.0, %v564
    %566 = vdwg.mxu0
    %567 = vmatprep.subr.mxu0 0.0
    %568 = vmatpush1.msra.mxu0 %v64
    %569 = vmatprep.subr.mxu0 0.0
    %570 = vmatpush1.msra.mxu0 0.0
    %571 = vmatprep.subr.mxu0 0.0
    %572 = vmatpush1.msra.mxu0 0.0
    %573 = vmatprep.subr.mxu0 0.0
    %574 = vmatpush1.msra.mxu0 0.0
    %575 = vmatprep.subr.mxu0 0.0
    %576 = vmatpush1.msra.mxu0 0.0
    %577 = vmatprep.subr.mxu0 0.0
    %578 = vmatpush1.msra.mxu0 0.0
    %579 = vmatprep.subr.mxu0 0.0
    %580 = vmatpush1.msra.mxu0 0.0
    %581 = vmatprep.subr.mxu0 0.0
    %582 = vmatpush1.msra.mxu0 0.0
    %583 = vmatprep.subr.mxu0 0.0
    %584 = vmatpush1.msra.mxu0 0.0
    %585 = vmatprep.subr.mxu0 0.0
    %586 = vmatpush1.msra.mxu0 0.0
    %587 = vmatprep.subr.mxu0 0.0
    %588 = vmatpush1.msra.mxu0 0.0
    %589 = vmatprep.subr.mxu0 0.0
    %590 = vmatpush1.msra.mxu0 0.0
    %591 = vmatprep.subr.mxu0 0.0
    %592 = vmatpush1.msra.mxu0 0.0
    %593 = vmatprep.subr.mxu0 0.0
    %594 = vmatpush1.msra.mxu0 0.0
    %595 = vmatprep.subr.mxu0 0.0
    %596 = vmatpush1.msra.mxu0 0.0
    %597 = vmatprep.subr.mxu0 0.0
    %598 = vmatpush1.msra.mxu0 0.0
    %599 = vmatprep.subr.mxu0 0.0
    %600 = vmatpush1.msra.mxu0 0.0
    %601 = vmatprep.subr.mxu0 0.0
    %602 = vmatpush1.msra.mxu0 0.0
    %603 = vmatprep.subr.mxu0 0.0
    %604 = vmatpush1.msra.mxu0 0.0
    %605 = vmatprep.subr.mxu0 0.0
    %606 = vmatpush1.msra.mxu0 0.0
    %607 = vmatprep.subr.mxu0 0.0
    %608 = vmatpush1.msra.mxu0 0.0
    %609 = vmatprep.subr.mxu0 0.0
    %610 = vmatpush1.msra.mxu0 0.0
    %611 = vmatprep.subr.mxu0 0.0
    %612 = vmatpush1.msra.mxu0 0.0
    %613 = vmatprep.subr.mxu0 0.0
    %614 = vmatpush1.msra.mxu0 0.0
    %615 = vmatprep.subr.mxu0 0.0
    %616 = vmatpush1.msra.mxu0 0.0
    %617 = vmatprep.subr.mxu0 0.0
    %618 = vmatpush1.msra.mxu0 0.0
    %619 = vmatprep.subr.mxu0 0.0
    %620 = vmatpush1.msra.mxu0 0.0
    %621 = vmatprep.subr.mxu0 0.0
    %622 = vmatpush1.msra.mxu0 0.0
    %623 = vmatprep.subr.mxu0 0.0
    %624 = vmatpush1.msra.mxu0 0.0
    %625 = vmatprep.subr.mxu0 0.0
    %626 = vmatpush1.msra.mxu0 0.0
    %627 = vmatprep.subr.mxu0 0.0
    %628 = vmatpush1.msra.mxu0 0.0
    %629 = vmatprep.subr.mxu0 0.0
    %630 = vmatpush1.msra.mxu0 0.0
    %631 = vmatprep.mubr.f32.mxu0 0.0
    %632 = vmatmul.mubr.f32.gmra.mrb[0].mxu0 %v494
    %v633 = vpop.f32.mrb[0].mxu0
    %v634 = vadd.f32 0.0, %v633
    %v635 = vpop.f32.mrb[0].mxu0
    %636 = vdwg.mxu0
    %v637 = vld [vmem:[#allocation7] sm:$0xff]
    %v638 = vld [vmem:[#allocation7 + $0x8] sm:$0xff]
    %v639 = vld [vmem:[#allocation7 + $0x10] sm:$0xff]
    %v640 = vld [vmem:[#allocation7 + $0x18] sm:$0xff]
    %v641 = vld [vmem:[#allocation7 + $0x20] sm:$0xff]
    %v642 = vld [vmem:[#allocation7 + $0x28] sm:$0xff]
    %v643 = vld [vmem:[#allocation7 + $0x30] sm:$0xff]
    %v644 = vld [vmem:[#allocation7 + $0x38] sm:$0xff]
    %v645 = vld [vmem:[#allocation7 + $0x40] sm:$0xff]
    %v646 = vld [vmem:[#allocation7 + $0x48] sm:$0xff]
    %v647 = vld [vmem:[#allocation7 + $0x50] sm:$0xff]
    %v648 = vld [vmem:[#allocation7 + $0x58] sm:$0xff]
    %v649 = vld [vmem:[#allocation7 + $0x60] sm:$0xff]
    %v650 = vld [vmem:[#allocation7 + $0x68] sm:$0xff]
    %v651 = vld [vmem:[#allocation7 + $0x70] sm:$0xff]
    %v652 = vld [vmem:[#allocation7 + $0x78] sm:$0xff]
    %v653 = vld [vmem:[#allocation7 + $0x80] sm:$0xff]
    %v654 = vld [vmem:[#allocation7 + $0x88] sm:$0xff]
    %v655 = vld [vmem:[#allocation7 + $0x90] sm:$0xff]
    %v656 = vld [vmem:[#allocation7 + $0x98] sm:$0xff]
    %v657 = vld [vmem:[#allocation7 + $0xa0] sm:$0xff]
    %v658 = vld [vmem:[#allocation7 + $0xa8] sm:$0xff]
    %v659 = vld [vmem:[#allocation7 + $0xb0] sm:$0xff]
    %v660 = vld [vmem:[#allocation7 + $0xb8] sm:$0xff]
    %v661 = vld [vmem:[#allocation7 + $0xc0] sm:$0xff]
    %v662 = vld [vmem:[#allocation7 + $0xc8] sm:$0xff]
    %v663 = vld [vmem:[#allocation7 + $0xd0] sm:$0xff]
    %v664 = vld [vmem:[#allocation7 + $0xd8] sm:$0xff]
    %v665 = vld [vmem:[#allocation7 + $0xe0] sm:$0xff]
    %v666 = vld [vmem:[#allocation7 + $0xe8] sm:$0xff]
    %v667 = vld [vmem:[#allocation7 + $0xf0] sm:$0xff]
    %v668 = vld [vmem:[#allocation7 + $0xf8] sm:$0xff]
    %v669 = vld [vmem:[#allocation7 + $0x100] sm:$0xff]
    %v670 = vld [vmem:[#allocation7 + $0x108] sm:$0xff]
    %v671 = vld [vmem:[#allocation7 + $0x110] sm:$0xff]
    %v672 = vld [vmem:[#allocation7 + $0x118] sm:$0xff]
    %v673 = vld [vmem:[#allocation7 + $0x120] sm:$0xff]
    %v674 = vld [vmem:[#allocation7 + $0x128] sm:$0xff]
    %v675 = vld [vmem:[#allocation7 + $0x130] sm:$0xff]
    %v676 = vld [vmem:[#allocation7 + $0x138] sm:$0xff]
    %v677 = vld [vmem:[#allocation7 + $0x140] sm:$0xff]
    %v678 = vld [vmem:[#allocation7 + $0x148] sm:$0xff]
    %v679 = vld [vmem:[#allocation7 + $0x150] sm:$0xff]
    %v680 = vld [vmem:[#allocation7 + $0x158] sm:$0xff]
    %v681 = vld [vmem:[#allocation7 + $0x160] sm:$0xff]
    %v682 = vld [vmem:[#allocation7 + $0x168] sm:$0xff]
    %v683 = vld [vmem:[#allocation7 + $0x170] sm:$0xff]
    %v684 = vld [vmem:[#allocation7 + $0x178] sm:$0xff]
    %v685 = vld [vmem:[#allocation7 + $0x180] sm:$0xff]
    %v686 = vld [vmem:[#allocation7 + $0x188] sm:$0xff]
    %v687 = vld [vmem:[#allocation7 + $0x190] sm:$0xff]
    %v688 = vld [vmem:[#allocation7 + $0x198] sm:$0xff]
    %v689 = vld [vmem:[#allocation7 + $0x1a0] sm:$0xff]
    %v690 = vld [vmem:[#allocation7 + $0x1a8] sm:$0xff]
    %v691 = vld [vmem:[#allocation7 + $0x1b0] sm:$0xff]
    %v692 = vld [vmem:[#allocation7 + $0x1b8] sm:$0xff]
    %v693 = vld [vmem:[#allocation7 + $0x1c0] sm:$0xff]
    %v694 = vld [vmem:[#allocation7 + $0x1c8] sm:$0xff]
    %v695 = vld [vmem:[#allocation7 + $0x1d0] sm:$0xff]
    %v696 = vld [vmem:[#allocation7 + $0x1d8] sm:$0xff]
    %v697 = vld [vmem:[#allocation7 + $0x1e0] sm:$0xff]
    %v698 = vld [vmem:[#allocation7 + $0x1e8] sm:$0xff]
    %v699 = vld [vmem:[#allocation7 + $0x1f0] sm:$0xff]
    %v700 = vld [vmem:[#allocation7 + $0x1f8] sm:$0xff]
    %v701 = vld [vmem:[#allocation7 + $0x200] sm:$0xff]
    %v702 = vld [vmem:[#allocation7 + $0x208] sm:$0xff]
    %v703 = vld [vmem:[#allocation7 + $0x210] sm:$0xff]
    %v704 = vld [vmem:[#allocation7 + $0x218] sm:$0xff]
    %v705 = vld [vmem:[#allocation7 + $0x220] sm:$0xff]
    %v706 = vld [vmem:[#allocation7 + $0x228] sm:$0xff]
    %v707 = vld [vmem:[#allocation7 + $0x230] sm:$0xff]
    %v708 = vld [vmem:[#allocation7 + $0x238] sm:$0xff]
    %v709 = vld [vmem:[#allocation7 + $0x240] sm:$0xff]
    %v710 = vld [vmem:[#allocation7 + $0x248] sm:$0xff]
    %v711 = vld [vmem:[#allocation7 + $0x250] sm:$0xff]
    %v712 = vld [vmem:[#allocation7 + $0x258] sm:$0xff]
    %v713 = vld [vmem:[#allocation7 + $0x260] sm:$0xff]
    %v714 = vld [vmem:[#allocation7 + $0x268] sm:$0xff]
    %v715 = vld [vmem:[#allocation7 + $0x270] sm:$0xff]
    %v716 = vld [vmem:[#allocation7 + $0x278] sm:$0xff]
    %v717 = vld [vmem:[#allocation7 + $0x280] sm:$0xff]
    %v718 = vld [vmem:[#allocation7 + $0x288] sm:$0xff]
    %v719 = vld [vmem:[#allocation7 + $0x290] sm:$0xff]
    %v720 = vld [vmem:[#allocation7 + $0x298] sm:$0xff]
    %v721 = vld [vmem:[#allocation7 + $0x2a0] sm:$0xff]
    %v722 = vld [vmem:[#allocation7 + $0x2a8] sm:$0xff]
    %v723 = vld [vmem:[#allocation7 + $0x2b0] sm:$0xff]
    %v724 = vld [vmem:[#allocation7 + $0x2b8] sm:$0xff]
    %v725 = vld [vmem:[#allocation7 + $0x2c0] sm:$0xff]
    %v726 = vld [vmem:[#allocation7 + $0x2c8] sm:$0xff]
    %v727 = vld [vmem:[#allocation7 + $0x2d0] sm:$0xff]
    %v728 = vld [vmem:[#allocation7 + $0x2d8] sm:$0xff]
    %v729 = vld [vmem:[#allocation7 + $0x2e0] sm:$0xff]
    %v730 = vld [vmem:[#allocation7 + $0x2e8] sm:$0xff]
    %v731 = vld [vmem:[#allocation7 + $0x2f0] sm:$0xff]
    %v732 = vld [vmem:[#allocation7 + $0x2f8] sm:$0xff]
    %v733 = vld [vmem:[#allocation7 + $0x300] sm:$0xff]
    %v734 = vld [vmem:[#allocation7 + $0x308] sm:$0xff]
    %v735 = vld [vmem:[#allocation7 + $0x310] sm:$0xff]
    %v736 = vld [vmem:[#allocation7 + $0x318] sm:$0xff]
    %v737 = vld [vmem:[#allocation7 + $0x320] sm:$0xff]
    %v738 = vld [vmem:[#allocation7 + $0x328] sm:$0xff]
    %v739 = vld [vmem:[#allocation7 + $0x330] sm:$0xff]
    %v740 = vld [vmem:[#allocation7 + $0x338] sm:$0xff]
    %v741 = vld [vmem:[#allocation7 + $0x340] sm:$0xff]
    %v742 = vld [vmem:[#allocation7 + $0x348] sm:$0xff]
    %v743 = vld [vmem:[#allocation7 + $0x350] sm:$0xff]
    %v744 = vld [vmem:[#allocation7 + $0x358] sm:$0xff]
    %v745 = vld [vmem:[#allocation7 + $0x360] sm:$0xff]
    %v746 = vld [vmem:[#allocation7 + $0x368] sm:$0xff]
    %v747 = vld [vmem:[#allocation7 + $0x370] sm:$0xff]
    %v748 = vld [vmem:[#allocation7 + $0x378] sm:$0xff]
    %v749 = vld [vmem:[#allocation7 + $0x380] sm:$0xff]
    %v750 = vld [vmem:[#allocation7 + $0x388] sm:$0xff]
    %v751 = vld [vmem:[#allocation7 + $0x390] sm:$0xff]
    %v752 = vld [vmem:[#allocation7 + $0x398] sm:$0xff]
    %v753 = vld [vmem:[#allocation7 + $0x3a0] sm:$0xff]
    %v754 = vld [vmem:[#allocation7 + $0x3a8] sm:$0xff]
    %v755 = vld [vmem:[#allocation7 + $0x3b0] sm:$0xff]
    %v756 = vld [vmem:[#allocation7 + $0x3b8] sm:$0xff]
    %v757 = vld [vmem:[#allocation7 + $0x3c0] sm:$0xff]
    %v758 = vld [vmem:[#allocation7 + $0x3c8] sm:$0xff]
    %v759 = vld [vmem:[#allocation7 + $0x3d0] sm:$0xff]
    %v760 = vld [vmem:[#allocation7 + $0x3d8] sm:$0xff]
    %v761 = vld [vmem:[#allocation7 + $0x3e0] sm:$0xff]
    %v762 = vld [vmem:[#allocation7 + $0x3e8] sm:$0xff]
    %v763 = vld [vmem:[#allocation7 + $0x3f0] sm:$0xff]
    %v764 = vld [vmem:[#allocation7 + $0x3f8] sm:$0xff]
    %v765 = vld [vmem:[#allocation7 + $0x400] sm:$0xff]
    %v766 = vld [vmem:[#allocation7 + $0x408] sm:$0xff]
    %v767 = vld [vmem:[#allocation7 + $0x410] sm:$0xff]
    %v768 = vld [vmem:[#allocation7 + $0x418] sm:$0xff]
    %v769 = vld [vmem:[#allocation7 + $0x420] sm:$0xff]
    %v770 = vld [vmem:[#allocation7 + $0x428] sm:$0xff]
    %v771 = vld [vmem:[#allocation7 + $0x430] sm:$0xff]
    %v772 = vld [vmem:[#allocation7 + $0x438] sm:$0xff]
    %v773 = vld [vmem:[#allocation7 + $0x440] sm:$0xff]
    %v774 = vld [vmem:[#allocation7 + $0x448] sm:$0xff]
    %v775 = vld [vmem:[#allocation7 + $0x450] sm:$0xff]
    %v776 = vld [vmem:[#allocation7 + $0x458] sm:$0xff]
    %v777 = vld [vmem:[#allocation7 + $0x460] sm:$0xff]
    %v778 = vld [vmem:[#allocation7 + $0x468] sm:$0xff]
    %v779 = vld [vmem:[#allocation7 + $0x470] sm:$0xff]
    %v780 = vld [vmem:[#allocation7 + $0x478] sm:$0xff]
    %v781 = vld [vmem:[%s3] sm:$0x7]
    %v788 = vrot.slane %v563, 7
    %vm789 = vcmask 1041409
    %v790 = vsel %vm789, %v788, %v419
    %v791 = vrot.slane %v565, 7
    %v792 = vsel %vm789, %v791, %v421
    %v793 = vrot.slane %v634, 7
    %v794 = vsel %vm789, %v793, %v490
    %798 = vmatprep.subr.mxu0 %v638
    %799 = vmatpush1.msra.mxu0 %v637
    %800 = vmatprep.subr.mxu0 %v641
    %801 = vmatpush1.msra.mxu0 %v640
    %802 = vmatprep.subr.mxu0 %v644
    %803 = vmatpush1.msra.mxu0 %v643
    %804 = vmatprep.subr.mxu0 %v647
    %805 = vmatpush1.msra.mxu0 %v646
    %806 = vmatprep.subr.mxu0 %v650
    %807 = vmatpush1.msra.mxu0 %v649
    %808 = vmatprep.subr.mxu0 %v653
    %809 = vmatpush1.msra.mxu0 %v652
    %810 = vmatprep.subr.mxu0 %v656
    %811 = vmatpush1.msra.mxu0 %v655
    %812 = vmatprep.subr.mxu0 %v659
    %813 = vmatpush1.msra.mxu0 %v658
    %814 = vmatprep.subr.mxu0 %v662
    %815 = vmatpush1.msra.mxu0 %v661
    %816 = vmatprep.subr.mxu0 %v665
    %817 = vmatpush1.msra.mxu0 %v664
    %818 = vmatprep.subr.mxu0 %v668
    %819 = vmatpush1.msra.mxu0 %v667
    %820 = vmatprep.subr.mxu0 %v671
    %821 = vmatpush1.msra.mxu0 %v670
    %822 = vmatprep.subr.mxu0 %v674
    %823 = vmatpush1.msra.mxu0 %v673
    %824 = vmatprep.subr.mxu0 %v677
    %825 = vmatpush1.msra.mxu0 %v676
    %826 = vmatprep.subr.mxu0 %v680
    %827 = vmatpush1.msra.mxu0 %v679
    %828 = vmatprep.subr.mxu0 %v683
    %829 = vmatpush1.msra.mxu0 %v682
    %830 = vmatprep.subr.mxu0 %v686
    %831 = vmatpush1.msra.mxu0 %v685
    %832 = vmatprep.subr.mxu0 %v689
    %833 = vmatpush1.msra.mxu0 %v688
    %834 = vmatprep.subr.mxu0 %v692
    %835 = vmatpush1.msra.mxu0 %v691
    %836 = vmatprep.subr.mxu0 %v695
    %837 = vmatpush1.msra.mxu0 %v694
    %838 = vmatprep.subr.mxu0 %v698
    %839 = vmatpush1.msra.mxu0 %v697
    %840 = vmatprep.subr.mxu0 %v701
    %841 = vmatpush1.msra.mxu0 %v700
    %842 = vmatprep.subr.mxu0 %v704
    %843 = vmatpush1.msra.mxu0 %v703
    %844 = vmatprep.subr.mxu0 %v707
    %845 = vmatpush1.msra.mxu0 %v706
    %846 = vmatprep.subr.mxu0 %v710
    %847 = vmatpush1.msra.mxu0 %v709
    %848 = vmatprep.subr.mxu0 %v713
    %849 = vmatpush1.msra.mxu0 %v712
    %850 = vmatprep.subr.mxu0 %v716
    %851 = vmatpush1.msra.mxu0 %v715
    %852 = vmatprep.subr.mxu0 %v719
    %853 = vmatpush1.msra.mxu0 %v718
    %854 = vmatprep.subr.mxu0 %v722
    %855 = vmatpush1.msra.mxu0 %v721
    %856 = vmatprep.subr.mxu0 %v725
    %857 = vmatpush1.msra.mxu0 %v724
    %858 = vmatprep.subr.mxu0 %v728
    %859 = vmatpush1.msra.mxu0 %v727
    %860 = vmatprep.subr.mxu0 %v731
    %861 = vmatpush1.msra.mxu0 %v730
    %862 = vmatprep.mubr.f32.mxu0 %v792
    %863 = vmatmul.mubr.f32.gmra.mrb[0].mxu0 %v790
    %v864 = vpop.f32.mrb[0].mxu0
    %v865 = vadd.f32 0.0, %v864
    %v866 = vpop.f32.mrb[0].mxu0
    %v867 = vadd.f32 0.0, %v866
    %868 = vdwg.mxu0
    %869 = vmatprep.subr.mxu0 %v734
    %870 = vmatpush1.msra.mxu0 %v733
    %871 = vmatprep.subr.mxu0 %v737
    %872 = vmatpush1.msra.mxu0 %v736
    %873 = vmatprep.subr.mxu0 %v740
    %874 = vmatpush1.msra.mxu0 %v739
    %875 = vmatprep.subr.mxu0 %v743
    %876 = vmatpush1.msra.mxu0 %v742
    %877 = vmatprep.subr.mxu0 %v746
    %878 = vmatpush1.msra.mxu0 %v745
    %879 = vmatprep.subr.mxu0 %v749
    %880 = vmatpush1.msra.mxu0 %v748
    %881 = vmatprep.subr.mxu0 %v752
    %882 = vmatpush1.msra.mxu0 %v751
    %883 = vmatprep.subr.mxu0 %v755
    %884 = vmatpush1.msra.mxu0 %v754
    %885 = vmatprep.subr.mxu0 %v758
    %886 = vmatpush1.msra.mxu0 %v757
    %887 = vmatprep.subr.mxu0 %v761
    %888 = vmatpush1.msra.mxu0 %v760
    %889 = vmatprep.subr.mxu0 %v764
    %890 = vmatpush1.msra.mxu0 %v763
    %891 = vmatprep.subr.mxu0 %v767
    %892 = vmatpush1.msra.mxu0 %v766
    %893 = vmatprep.subr.mxu0 %v770
    %894 = vmatpush1.msra.mxu0 %v769
    %895 = vmatprep.subr.mxu0 %v773
    %896 = vmatpush1.msra.mxu0 %v772
    %897 = vmatprep.subr.mxu0 %v776
    %898 = vmatpush1.msra.mxu0 %v775
    %899 = vmatprep.subr.mxu0 %v779
    %900 = vmatpush1.msra.mxu0 %v778
    %901 = vmatprep.subr.mxu0 0.0
    %902 = vmatpush1.msra.mxu0 0.0
    %903 = vmatprep.subr.mxu0 0.0
    %904 = vmatpush1.msra.mxu0 0.0
    %905 = vmatprep.subr.mxu0 0.0
    %906 = vmatpush1.msra.mxu0 0.0
    %907 = vmatprep.subr.mxu0 0.0
    %908 = vmatpush1.msra.mxu0 0.0
    %909 = vmatprep.subr.mxu0 0.0
    %910 = vmatpush1.msra.mxu0 0.0
    %911 = vmatprep.subr.mxu0 0.0
    %912 = vmatpush1.msra.mxu0 0.0
    %913 = vmatprep.subr.mxu0 0.0
    %914 = vmatpush1.msra.mxu0 0.0
    %915 = vmatprep.subr.mxu0 0.0
    %916 = vmatpush1.msra.mxu0 0.0
    %917 = vmatprep.subr.mxu0 0.0
    %918 = vmatpush1.msra.mxu0 0.0
    %919 = vmatprep.subr.mxu0 0.0
    %920 = vmatpush1.msra.mxu0 0.0
    %921 = vmatprep.subr.mxu0 0.0
    %922 = vmatpush1.msra.mxu0 0.0
    %923 = vmatprep.subr.mxu0 0.0
    %924 = vmatpush1.msra.mxu0 0.0
    %925 = vmatprep.subr.mxu0 0.0
    %926 = vmatpush1.msra.mxu0 0.0
    %927 = vmatprep.subr.mxu0 0.0
    %928 = vmatpush1.msra.mxu0 0.0
    %929 = vmatprep.subr.mxu0 0.0
    %930 = vmatpush1.msra.mxu0 0.0
    %931 = vmatprep.subr.mxu0 0.0
    %932 = vmatpush1.msra.mxu0 0.0
    %933 = vmatprep.mubr.f32.mxu0 0.0
    %934 = vmatmul.mubr.f32.gmra.mrb[0].mxu0 %v794
    %v935 = vpop.f32.mrb[0].mxu0
    %v936 = vadd.f32 %v865, %v935
    %v937 = vpop.f32.mrb[0].mxu0
    %v938 = vadd.f32 %v867, %v937
    %939 = vdwg.mxu0
    %940 = vmatprep.subr.mxu0 0.0
    %941 = vmatpush1.msra.mxu0 %v639
    %942 = vmatprep.subr.mxu0 0.0
    %943 = vmatpush1.msra.mxu0 %v642
    %944 = vmatprep.subr.mxu0 0.0
    %945 = vmatpush1.msra.mxu0 %v645
    %946 = vmatprep.subr.mxu0 0.0
    %947 = vmatpush1.msra.mxu0 %v648
    %948 = vmatprep.subr.mxu0 0.0
    %949 = vmatpush1.msra.mxu0 %v651
    %950 = vmatprep.subr.mxu0 0.0
    %951 = vmatpush1.msra.mxu0 %v654
    %952 = vmatprep.subr.mxu0 0.0
    %953 = vmatpush1.msra.mxu0 %v657
    %954 = vmatprep.subr.mxu0 0.0
    %955 = vmatpush1.msra.mxu0 %v660
    %956 = vmatprep.subr.mxu0 0.0
    %957 = vmatpush1.msra.mxu0 %v663
    %958 = vmatprep.subr.mxu0 0.0
    %959 = vmatpush1.msra.mxu0 %v666
    %960 = vmatprep.subr.mxu0 0.0
    %961 = vmatpush1.msra.mxu0 %v669
    %962 = vmatprep.subr.mxu0 0.0
    %963 = vmatpush1.msra.mxu0 %v672
    %964 = vmatprep.subr.mxu0 0.0
    %965 = vmatpush1.msra.mxu0 %v675
    %966 = vmatprep.subr.mxu0 0.0
    %967 = vmatpush1.msra.mxu0 %v678
    %968 = vmatprep.subr.mxu0 0.0
    %969 = vmatpush1.msra.mxu0 %v681
    %970 = vmatprep.subr.mxu0 0.0
    %971 = vmatpush1.msra.mxu0 %v684
    %972 = vmatprep.subr.mxu0 0.0
    %973 = vmatpush1.msra.mxu0 %v687
    %974 = vmatprep.subr.mxu0 0.0
    %975 = vmatpush1.msra.mxu0 %v690
    %976 = vmatprep.subr.mxu0 0.0
    %977 = vmatpush1.msra.mxu0 %v693
    %978 = vmatprep.subr.mxu0 0.0
    %979 = vmatpush1.msra.mxu0 %v696
    %980 = vmatprep.subr.mxu0 0.0
    %981 = vmatpush1.msra.mxu0 %v699
    %982 = vmatprep.subr.mxu0 0.0
    %983 = vmatpush1.msra.mxu0 %v702
    %984 = vmatprep.subr.mxu0 0.0
    %985 = vmatpush1.msra.mxu0 %v705
    %986 = vmatprep.subr.mxu0 0.0
    %987 = vmatpush1.msra.mxu0 %v708
    %988 = vmatprep.subr.mxu0 0.0
    %989 = vmatpush1.msra.mxu0 %v711
    %990 = vmatprep.subr.mxu0 0.0
    %991 = vmatpush1.msra.mxu0 %v714
    %992 = vmatprep.subr.mxu0 0.0
    %993 = vmatpush1.msra.mxu0 %v717
    %994 = vmatprep.subr.mxu0 0.0
    %995 = vmatpush1.msra.mxu0 %v720
    %996 = vmatprep.subr.mxu0 0.0
    %997 = vmatpush1.msra.mxu0 %v723
    %998 = vmatprep.subr.mxu0 0.0
    %999 = vmatpush1.msra.mxu0 %v726
    %1000 = vmatprep.subr.mxu0 0.0
    %1001 = vmatpush1.msra.mxu0 %v729
    %1002 = vmatprep.subr.mxu0 0.0
    %1003 = vmatpush1.msra.mxu0 %v732
    %1004 = vmatprep.mubr.f32.mxu0 %v792
    %1005 = vmatmul.mubr.f32.gmra.mrb[0].mxu0 %v790
    %v1006 = vpop.f32.mrb[0].mxu0
    %v1007 = vadd.f32 0.0, %v1006
    %v1008 = vpop.f32.mrb[0].mxu0
    %1009 = vdwg.mxu0
    %1010 = vmatprep.subr.mxu0 0.0
    %1011 = vmatpush1.msra.mxu0 %v735
    %1012 = vmatprep.subr.mxu0 0.0
    %1013 = vmatpush1.msra.mxu0 %v738
    %1014 = vmatprep.subr.mxu0 0.0
    %1015 = vmatpush1.msra.mxu0 %v741
    %1016 = vmatprep.subr.mxu0 0.0
    %1017 = vmatpush1.msra.mxu0 %v744
    %1018 = vmatprep.subr.mxu0 0.0
    %1019 = vmatpush1.msra.mxu0 %v747
    %1020 = vmatprep.subr.mxu0 0.0
    %1021 = vmatpush1.msra.mxu0 %v750
    %1022 = vmatprep.subr.mxu0 0.0
    %1023 = vmatpush1.msra.mxu0 %v753
    %1024 = vmatprep.subr.mxu0 0.0
    %1025 = vmatpush1.msra.mxu0 %v756
    %1026 = vmatprep.subr.mxu0 0.0
    %1027 = vmatpush1.msra.mxu0 %v759
    %1028 = vmatprep.subr.mxu0 0.0
    %1029 = vmatpush1.msra.mxu0 %v762
    %1030 = vmatprep.subr.mxu0 0.0
    %1031 = vmatpush1.msra.mxu0 %v765
    %1032 = vmatprep.subr.mxu0 0.0
    %1033 = vmatpush1.msra.mxu0 %v768
    %1034 = vmatprep.subr.mxu0 0.0
    %1035 = vmatpush1.msra.mxu0 %v771
    %1036 = vmatprep.subr.mxu0 0.0
    %1037 = vmatpush1.msra.mxu0 %v774
    %1038 = vmatprep.subr.mxu0 0.0
    %1039 = vmatpush1.msra.mxu0 %v777
    %1040 = vmatprep.subr.mxu0 0.0
    %1041 = vmatpush1.msra.mxu0 %v780
    %1042 = vmatprep.subr.mxu0 0.0
    %1043 = vmatpush1.msra.mxu0 0.0
    %1044 = vmatprep.subr.mxu0 0.0
    %1045 = vmatpush1.msra.mxu0 0.0
    %1046 = vmatprep.subr.mxu0 0.0
    %1047 = vmatpush1.msra.mxu0 0.0
    %1048 = vmatprep.subr.mxu0 0.0
    %1049 = vmatpush1.msra.mxu0 0.0
    %1050 = vmatprep.subr.mxu0 0.0
    %1051 = vmatpush1.msra.mxu0 0.0
    %1052 = vmatprep.subr.mxu0 0.0
    %1053 = vmatpush1.msra.mxu0 0.0
    %1054 = vmatprep.subr.mxu0 0.0
    %1055 = vmatpush1.msra.mxu0 0.0
    %1056 = vmatprep.subr.mxu0 0.0
    %1057 = vmatpush1.msra.mxu0 0.0
    %1058 = vmatprep.subr.mxu0 0.0
    %1059 = vmatpush1.msra.mxu0 0.0
    %1060 = vmatprep.subr.mxu0 0.0
    %1061 = vmatpush1.msra.mxu0 0.0
    %1062 = vmatprep.subr.mxu0 0.0
    %1063 = vmatpush1.msra.mxu0 0.0
    %1064 = vmatprep.subr.mxu0 0.0
    %1065 = vmatpush1.msra.mxu0 0.0
    %1066 = vmatprep.subr.mxu0 0.0
    %1067 = vmatpush1.msra.mxu0 0.0
    %1068 = vmatprep.subr.mxu0 0.0
    %1069 = vmatpush1.msra.mxu0 0.0
    %1070 = vmatprep.subr.mxu0 0.0
    %1071 = vmatpush1.msra.mxu0 0.0
    %1072 = vmatprep.subr.mxu0 0.0
    %1073 = vmatpush1.msra.mxu0 0.0
    %1074 = vmatprep.mubr.f32.mxu0 0.0
    %1075 = vmatmul.mubr.f32.gmra.mrb[0].mxu0 %v794
    %v1076 = vpop.f32.mrb[0].mxu0
    %v1077 = vadd.f32 %v1007, %v1076
    %v1078 = vpop.f32.mrb[0].mxu0
    %1079 = vdwg.mxu0
    %v1082 = vrot.slane %v347, 7
    %v1083 = vsel %vm789, %v1082, %v346
    %v1085 = vmul.f32 %v936, %v1083
    %v1086 = vmul.f32 %v938, %v1083
    %v1087 = vmul.f32 %v1077, %v1083
    %v1089 = vlaneseq
    %v1090 = vshrl.u32 %v1089, 7
    %v1091 = vsub.s32 0, %v1090
    %v1092 = vrot.slane %v781, %v1091
    %v1093 = vlaneseq
    %v1094 = vshrl.u32 %v1093, 7
    %v1095 = vsub.s32 1, %v1094
    %v1096 = vrot.slane %v781, %v1095
    %v1097 = vlaneseq
    %v1098 = vshrl.u32 %v1097, 7
    %v1099 = vsub.s32 2, %v1098
    %v1100 = vrot.slane %v781, %v1099
    %v1104 = vadd.f32 %v1085, %v1092
    %v1105 = vadd.f32 %v1086, %v1096
    %v1106 = vadd.f32 %v1087, %v1100
    %v1107 = vrot.slane %v419, 1
    %v1108 = vsel %vm789, %v563, %v1107
    %v1109 = vrot.slane %v421, 1
    %v1110 = vsel %vm789, %v565, %v1109
    %v1111 = vrot.slane %v490, 1
    %v1112 = vsel %vm789, %v634, %v1111
    %1116 = vmatprep.subr.mxu0 %v638
    %1117 = vmatpush1.msra.mxu0 %v637
    %1118 = vmatprep.subr.mxu0 %v641
    %1119 = vmatpush1.msra.mxu0 %v640
    %1120 = vmatprep.subr.mxu0 %v644
    %1121 = vmatpush1.msra.mxu0 %v643
    %1122 = vmatprep.subr.mxu0 %v647
    %1123 = vmatpush1.msra.mxu0 %v646
    %1124 = vmatprep.subr.mxu0 %v650
    %1125 = vmatpush1.msra.mxu0 %v649
    %1126 = vmatprep.subr.mxu0 %v653
    %1127 = vmatpush1.msra.mxu0 %v652
    %1128 = vmatprep.subr.mxu0 %v656
    %1129 = vmatpush1.msra.mxu0 %v655
    %1130 = vmatprep.subr.mxu0 %v659
    %1131 = vmatpush1.msra.mxu0 %v658
    %1132 = vmatprep.subr.mxu0 %v662
    %1133 = vmatpush1.msra.mxu0 %v661
    %1134 = vmatprep.subr.mxu0 %v665
    %1135 = vmatpush1.msra.mxu0 %v664
    %1136 = vmatprep.subr.mxu0 %v668
    %1137 = vmatpush1.msra.mxu0 %v667
    %1138 = vmatprep.subr.mxu0 %v671
    %1139 = vmatpush1.msra.mxu0 %v670
    %1140 = vmatprep.subr.mxu0 %v674
    %1141 = vmatpush1.msra.mxu0 %v673
    %1142 = vmatprep.subr.mxu0 %v677
    %1143 = vmatpush1.msra.mxu0 %v676
    %1144 = vmatprep.subr.mxu0 %v680
    %1145 = vmatpush1.msra.mxu0 %v679
    %1146 = vmatprep.subr.mxu0 %v683
    %1147 = vmatpush1.msra.mxu0 %v682
    %1148 = vmatprep.subr.mxu0 %v686
    %1149 = vmatpush1.msra.mxu0 %v685
    %1150 = vmatprep.subr.mxu0 %v689
    %1151 = vmatpush1.msra.mxu0 %v688
    %1152 = vmatprep.subr.mxu0 %v692
    %1153 = vmatpush1.msra.mxu0 %v691
    %1154 = vmatprep.subr.mxu0 %v695
    %1155 = vmatpush1.msra.mxu0 %v694
    %1156 = vmatprep.subr.mxu0 %v698
    %1157 = vmatpush1.msra.mxu0 %v697
    %1158 = vmatprep.subr.mxu0 %v701
    %1159 = vmatpush1.msra.mxu0 %v700
    %1160 = vmatprep.subr.mxu0 %v704
    %1161 = vmatpush1.msra.mxu0 %v703
    %1162 = vmatprep.subr.mxu0 %v707
    %1163 = vmatpush1.msra.mxu0 %v706
    %1164 = vmatprep.subr.mxu0 %v710
    %1165 = vmatpush1.msra.mxu0 %v709
    %1166 = vmatprep.subr.mxu0 %v713
    %1167 = vmatpush1.msra.mxu0 %v712
    %1168 = vmatprep.subr.mxu0 %v716
    %1169 = vmatpush1.msra.mxu0 %v715
    %1170 = vmatprep.subr.mxu0 %v719
    %1171 = vmatpush1.msra.mxu0 %v718
    %1172 = vmatprep.subr.mxu0 %v722
    %1173 = vmatpush1.msra.mxu0 %v721
    %1174 = vmatprep.subr.mxu0 %v725
    %1175 = vmatpush1.msra.mxu0 %v724
    %1176 = vmatprep.subr.mxu0 %v728
    %1177 = vmatpush1.msra.mxu0 %v727
    %1178 = vmatprep.subr.mxu0 %v731
    %1179 = vmatpush1.msra.mxu0 %v730
    %1180 = vmatprep.mubr.f32.mxu0 %v1110
    %1181 = vmatmul.mubr.f32.gmra.mrb[0].mxu0 %v1108
    %v1182 = vpop.f32.mrb[0].mxu0
    %v1183 = vadd.f32 0.0, %v1182
    %v1184 = vpop.f32.mrb[0].mxu0
    %v1185 = vadd.f32 0.0, %v1184
    %1186 = vdwg.mxu0
    %1187 = vmatprep.subr.mxu0 %v734
    %1188 = vmatpush1.msra.mxu0 %v733
    %1189 = vmatprep.subr.mxu0 %v737
    %1190 = vmatpush1.msra.mxu0 %v736
    %1191 = vmatprep.subr.mxu0 %v740
    %1192 = vmatpush1.msra.mxu0 %v739
    %1193 = vmatprep.subr.mxu0 %v743
    %1194 = vmatpush1.msra.mxu0 %v742
    %1195 = vmatprep.subr.mxu0 %v746
    %1196 = vmatpush1.msra.mxu0 %v745
    %1197 = vmatprep.subr.mxu0 %v749
    %1198 = vmatpush1.msra.mxu0 %v748
    %1199 = vmatprep.subr.mxu0 %v752
    %1200 = vmatpush1.msra.mxu0 %v751
    %1201 = vmatprep.subr.mxu0 %v755
    %1202 = vmatpush1.msra.mxu0 %v754
    %1203 = vmatprep.subr.mxu0 %v758
    %1204 = vmatpush1.msra.mxu0 %v757
    %1205 = vmatprep.subr.mxu0 %v761
    %1206 = vmatpush1.msra.mxu0 %v760
    %1207 = vmatprep.subr.mxu0 %v764
    %1208 = vmatpush1.msra.mxu0 %v763
    %1209 = vmatprep.subr.mxu0 %v767
    %1210 = vmatpush1.msra.mxu0 %v766
    %1211 = vmatprep.subr.mxu0 %v770
    %1212 = vmatpush1.msra.mxu0 %v769
    %1213 = vmatprep.subr.mxu0 %v773
    %1214 = vmatpush1.msra.mxu0 %v772
    %1215 = vmatprep.subr.mxu0 %v776
    %1216 = vmatpush1.msra.mxu0 %v775
    %1217 = vmatprep.subr.mxu0 %v779
    %1218 = vmatpush1.msra.mxu0 %v778
    %1219 = vmatprep.subr.mxu0 0.0
    %1220 = vmatpush1.msra.mxu0 0.0
    %1221 = vmatprep.subr.mxu0 0.0
    %1222 = vmatpush1.msra.mxu0 0.0
    %1223 = vmatprep.subr.mxu0 0.0
    %1224 = vmatpush1.msra.mxu0 0.0
    %1225 = vmatprep.subr.mxu0 0.0
    %1226 = vmatpush1.msra.mxu0 0.0
    %1227 = vmatprep.subr.mxu0 0.0
    %1228 = vmatpush1.msra.mxu0 0.0
    %1229 = vmatprep.subr.mxu0 0.0
    %1230 = vmatpush1.msra.mxu0 0.0
    %1231 = vmatprep.subr.mxu0 0.0
    %1232 = vmatpush1.msra.mxu0 0.0
    %1233 = vmatprep.subr.mxu0 0.0
    %1234 = vmatpush1.msra.mxu0 0.0
    %1235 = vmatprep.subr.mxu0 0.0
    %1236 = vmatpush1.msra.mxu0 0.0
    %1237 = vmatprep.subr.mxu0 0.0
    %1238 = vmatpush1.msra.mxu0 0.0
    %1239 = vmatprep.subr.mxu0 0.0
    %1240 = vmatpush1.msra.mxu0 0.0
    %1241 = vmatprep.subr.mxu0 0.0
    %1242 = vmatpush1.msra.mxu0 0.0
    %1243 = vmatprep.subr.mxu0 0.0
    %1244 = vmatpush1.msra.mxu0 0.0
    %1245 = vmatprep.subr.mxu0 0.0
    %1246 = vmatpush1.msra.mxu0 0.0
    %1247 = vmatprep.subr.mxu0 0.0
    %1248 = vmatpush1.msra.mxu0 0.0
    %1249 = vmatprep.subr.mxu0 0.0
    %1250 = vmatpush1.msra.mxu0 0.0
    %1251 = vmatprep.mubr.f32.mxu0 0.0
    %1252 = vmatmul.mubr.f32.gmra.mrb[0].mxu0 %v1112
    %v1253 = vpop.f32.mrb[0].mxu0
    %v1254 = vadd.f32 %v1183, %v1253
    %v1255 = vpop.f32.mrb[0].mxu0
    %v1256 = vadd.f32 %v1185, %v1255
    %1257 = vdwg.mxu0
    %1258 = vmatprep.subr.mxu0 0.0
    %1259 = vmatpush1.msra.mxu0 %v639
    %1260 = vmatprep.subr.mxu0 0.0
    %1261 = vmatpush1.msra.mxu0 %v642
    %1262 = vmatprep.subr.mxu0 0.0
    %1263 = vmatpush1.msra.mxu0 %v645
    %1264 = vmatprep.subr.mxu0 0.0
    %1265 = vmatpush1.msra.mxu0 %v648
    %1266 = vmatprep.subr.mxu0 0.0
    %1267 = vmatpush1.msra.mxu0 %v651
    %1268 = vmatprep.subr.mxu0 0.0
    %1269 = vmatpush1.msra.mxu0 %v654
    %1270 = vmatprep.subr.mxu0 0.0
    %1271 = vmatpush1.msra.mxu0 %v657
    %1272 = vmatprep.subr.mxu0 0.0
    %1273 = vmatpush1.msra.mxu0 %v660
    %1274 = vmatprep.subr.mxu0 0.0
    %1275 = vmatpush1.msra.mxu0 %v663
    %1276 = vmatprep.subr.mxu0 0.0
    %1277 = vmatpush1.msra.mxu0 %v666
    %1278 = vmatprep.subr.mxu0 0.0
    %1279 = vmatpush1.msra.mxu0 %v669
    %1280 = vmatprep.subr.mxu0 0.0
    %1281 = vmatpush1.msra.mxu0 %v672
    %1282 = vmatprep.subr.mxu0 0.0
    %1283 = vmatpush1.msra.mxu0 %v675
    %1284 = vmatprep.subr.mxu0 0.0
    %1285 = vmatpush1.msra.mxu0 %v678
    %1286 = vmatprep.subr.mxu0 0.0
    %1287 = vmatpush1.msra.mxu0 %v681
    %1288 = vmatprep.subr.mxu0 0.0
    %1289 = vmatpush1.msra.mxu0 %v684
    %1290 = vmatprep.subr.mxu0 0.0
    %1291 = vmatpush1.msra.mxu0 %v687
    %1292 = vmatprep.subr.mxu0 0.0
    %1293 = vmatpush1.msra.mxu0 %v690
    %1294 = vmatprep.subr.mxu0 0.0
    %1295 = vmatpush1.msra.mxu0 %v693
    %1296 = vmatprep.subr.mxu0 0.0
    %1297 = vmatpush1.msra.mxu0 %v696
    %1298 = vmatprep.subr.mxu0 0.0
    %1299 = vmatpush1.msra.mxu0 %v699
    %1300 = vmatprep.subr.mxu0 0.0
    %1301 = vmatpush1.msra.mxu0 %v702
    %1302 = vmatprep.subr.mxu0 0.0
    %1303 = vmatpush1.msra.mxu0 %v705
    %1304 = vmatprep.subr.mxu0 0.0
    %1305 = vmatpush1.msra.mxu0 %v708
    %1306 = vmatprep.subr.mxu0 0.0
    %1307 = vmatpush1.msra.mxu0 %v711
    %1308 = vmatprep.subr.mxu0 0.0
    %1309 = vmatpush1.msra.mxu0 %v714
    %1310 = vmatprep.subr.mxu0 0.0
    %1311 = vmatpush1.msra.mxu0 %v717
    %1312 = vmatprep.subr.mxu0 0.0
    %1313 = vmatpush1.msra.mxu0 %v720
    %1314 = vmatprep.subr.mxu0 0.0
    %1315 = vmatpush1.msra.mxu0 %v723
    %1316 = vmatprep.subr.mxu0 0.0
    %1317 = vmatpush1.msra.mxu0 %v726
    %1318 = vmatprep.subr.mxu0 0.0
    %1319 = vmatpush1.msra.mxu0 %v729
    %1320 = vmatprep.subr.mxu0 0.0
    %1321 = vmatpush1.msra.mxu0 %v732
    %1322 = vmatprep.mubr.f32.mxu0 %v1110
    %1323 = vmatmul.mubr.f32.gmra.mrb[0].mxu0 %v1108
    %v1324 = vpop.f32.mrb[0].mxu0
    %v1325 = vadd.f32 0.0, %v1324
    %v1326 = vpop.f32.mrb[0].mxu0
    %1327 = vdwg.mxu0
    %1328 = vmatprep.subr.mxu0 0.0
    %1329 = vmatpush1.msra.mxu0 %v735
    %1330 = vmatprep.subr.mxu0 0.0
    %1331 = vmatpush1.msra.mxu0 %v738
    %1332 = vmatprep.subr.mxu0 0.0
    %1333 = vmatpush1.msra.mxu0 %v741
    %1334 = vmatprep.subr.mxu0 0.0
    %1335 = vmatpush1.msra.mxu0 %v744
    %1336 = vmatprep.subr.mxu0 0.0
    %1337 = vmatpush1.msra.mxu0 %v747
    %1338 = vmatprep.subr.mxu0 0.0
    %1339 = vmatpush1.msra.mxu0 %v750
    %1340 = vmatprep.subr.mxu0 0.0
    %1341 = vmatpush1.msra.mxu0 %v753
    %1342 = vmatprep.subr.mxu0 0.0
    %1343 = vmatpush1.msra.mxu0 %v756
    %1344 = vmatprep.subr.mxu0 0.0
    %1345 = vmatpush1.msra.mxu0 %v759
    %1346 = vmatprep.subr.mxu0 0.0
    %1347 = vmatpush1.msra.mxu0 %v762
    %1348 = vmatprep.subr.mxu0 0.0
    %1349 = vmatpush1.msra.mxu0 %v765
    %1350 = vmatprep.subr.mxu0 0.0
    %1351 = vmatpush1.msra.mxu0 %v768
    %1352 = vmatprep.subr.mxu0 0.0
    %1353 = vmatpush1.msra.mxu0 %v771
    %1354 = vmatprep.subr.mxu0 0.0
    %1355 = vmatpush1.msra.mxu0 %v774
    %1356 = vmatprep.subr.mxu0 0.0
    %1357 = vmatpush1.msra.mxu0 %v777
    %1358 = vmatprep.subr.mxu0 0.0
    %1359 = vmatpush1.msra.mxu0 %v780
    %1360 = vmatprep.subr.mxu0 0.0
    %1361 = vmatpush1.msra.mxu0 0.0
    %1362 = vmatprep.subr.mxu0 0.0
    %1363 = vmatpush1.msra.mxu0 0.0
    %1364 = vmatprep.subr.mxu0 0.0
    %1365 = vmatpush1.msra.mxu0 0.0
    %1366 = vmatprep.subr.mxu0 0.0
    %1367 = vmatpush1.msra.mxu0 0.0
    %1368 = vmatprep.subr.mxu0 0.0
    %1369 = vmatpush1.msra.mxu0 0.0
    %1370 = vmatprep.subr.mxu0 0.0
    %1371 = vmatpush1.msra.mxu0 0.0
    %1372 = vmatprep.subr.mxu0 0.0
    %1373 = vmatpush1.msra.mxu0 0.0
    %1374 = vmatprep.subr.mxu0 0.0
    %1375 = vmatpush1.msra.mxu0 0.0
    %1376 = vmatprep.subr.mxu0 0.0
    %1377 = vmatpush1.msra.mxu0 0.0
    %1378 = vmatprep.subr.mxu0 0.0
    %1379 = vmatpush1.msra.mxu0 0.0
    %1380 = vmatprep.subr.mxu0 0.0
    %1381 = vmatpush1.msra.mxu0 0.0
    %1382 = vmatprep.subr.mxu0 0.0
    %1383 = vmatpush1.msra.mxu0 0.0
    %1384 = vmatprep.subr.mxu0 0.0
    %1385 = vmatpush1.msra.mxu0 0.0
    %1386 = vmatprep.subr.mxu0 0.0
    %1387 = vmatpush1.msra.mxu0 0.0
    %1388 = vmatprep.subr.mxu0 0.0
    %1389 = vmatpush1.msra.mxu0 0.0
    %1390 = vmatprep.subr.mxu0 0.0
    %1391 = vmatpush1.msra.mxu0 0.0
    %1392 = vmatprep.mubr.f32.mxu0 0.0
    %1393 = vmatmul.mubr.f32.gmra.mrb[0].mxu0 %v1112
    %v1394 = vpop.f32.mrb[0].mxu0
    %v1395 = vadd.f32 %v1325, %v1394
    %v1396 = vpop.f32.mrb[0].mxu0
    %1397 = vdwg.mxu0
    %v1398 = vrot.slane %v346, 1
    %v1399 = vsel %vm789, %v347, %v1398
    %v1401 = vmul.f32 %v1254, %v1399
    %v1402 = vmul.f32 %v1256, %v1399
    %v1403 = vmul.f32 %v1395, %v1399
    %v1404 = vadd.f32 %v1401, %v1092
    %v1405 = vadd.f32 %v1402, %v1096
    %v1406 = vadd.f32 %v1403, %v1100
    %v1407 = vmul.f32 %v419, %v419
    %v1408 = vmul.f32 %v421, %v421
    %v1409 = vmul.f32 %v490, %v490
    %v1410 = vmul.f32 %v563, %v563
    %v1411 = vmul.f32 %v565, %v565
    %v1412 = vmul.f32 %v634, %v634
    %v1419 = vrot.slane %v1410, 7
    %v1420 = vsel %vm789, %v1419, %v1407
    %v1421 = vrot.slane %v1411, 7
    %v1422 = vsel %vm789, %v1421, %v1408
    %v1423 = vrot.slane %v1412, 7
    %v1424 = vsel %vm789, %v1423, %v1409
    %vm1428 = vcmask 1041408
    %v1429 = vsel %vm1428, %v1420, 0.0
    %v1430 = vsel %vm1428, %v1422, 0.0
    %v1431 = vadd.f32 %v1429, %v1430
    %v1432 = vsel %vm1428, %v1424, 0.0
    %v1433 = vadd.f32 %v1431, %v1432
    %1434 = vadd.xlane.f32.xlu0 %v1433
    %v1435 = vpop.xlane.xlu0 %1434
    %v1436 = vrsqrt.pop %v1435
    %v1438 = vrot.slane %v1436, 1
    %v1441 = vmul.f32 %v419, %v1436
    %v1442 = vmul.f32 %v421, %v1436
    %v1443 = vmul.f32 %v490, %v1436
    %v1444 = vmul.f32 %v563, %v1438
    %v1445 = vmul.f32 %v565, %v1438
    %v1446 = vmul.f32 %v634, %v1438
    %v1447 = vmul.f32 %v1104, %v1104
    %v1448 = vmul.f32 %v1105, %v1105
    %v1449 = vmul.f32 %v1106, %v1106
    %v1450 = vsel %vm1428, %v1447, 0.0
    %v1451 = vsel %vm1428, %v1448, 0.0
    %v1452 = vadd.f32 %v1450, %v1451
    %v1453 = vsel %vm1428, %v1449, 0.0
    %v1454 = vadd.f32 %v1452, %v1453
    %1455 = vadd.xlane.f32.xlu0 %v1454
    %v1456 = vpop.xlane.xlu0 %1455
    %v1457 = vrsqrt.pop %v1456
    %v1458 = vmul.f32 %v1104, %v1457
    %v1459 = vmul.f32 %v1105, %v1457
    %v1460 = vmul.f32 %v1106, %v1457
    %v1464 = vrot.slane %v1458, 1
    %v1465 = vrot.slane %v1459, 1
    %v1466 = vrot.slane %v1460, 1
    %v1473 = vadd.f32 %v1441, %v1458
    %v1474 = vadd.f32 %v1442, %v1459
    %v1475 = vadd.f32 %v1443, %v1460
    %v1476 = vadd.f32 %v1444, %v1464
    %v1477 = vadd.f32 %v1445, %v1465
    %v1478 = vadd.f32 %v1446, %v1466
    %v1485 = vcombine.low %v1473, %v1474
    %v1487 = vunpack.c.l.s4 1983009808
    %v1488 = vunpack.c.0.s8 %v1487
    %v1489 = vlaneseq
    %v1490 = vshrl.u32 %v1489, 7
    %v1491 = vsub.s32 %v1488, %v1490
    %v1492 = vrot.slane %v1485, %v1491
    %v1494 = vunpack.c.l.s4 1983009808
    %v1495 = vunpack.c.0.s8 %v1494
    %v1496 = vlaneseq
    %v1497 = vshrl.u32 %v1496, 7
    %v1498 = vsub.s32 %v1495, %v1497
    %v1499 = vrot.slane %v1475, %v1498
    %v1500 = vcombine.low %v1492, %v1499
    %v1501 = vcombine.low %v1476, %v1477
    %v1503 = vunpack.c.l.s4 1983009808
    %v1504 = vunpack.c.0.s8 %v1503
    %v1505 = vlaneseq
    %v1506 = vshrl.u32 %v1505, 7
    %v1507 = vsub.s32 %v1504, %v1506
    %v1508 = vrot.slane %v1501, %v1507
    %v1510 = vunpack.c.l.s4 1983009808
    %v1511 = vunpack.c.0.s8 %v1510
    %v1512 = vlaneseq
    %v1513 = vshrl.u32 %v1512, 7
    %v1514 = vsub.s32 %v1511, %v1513
    %v1515 = vrot.slane %v1478, %v1514
    %v1516 = vcombine.low %v1508, %v1515
    %vm1517 = vcmask 1042434
    %vm1518 = vcmask 1044484
    %v1519 = vsel %vm1518, %v1500, %v1500
    %vm1520 = vcmask 1046534
    %v1521 = vsel %vm1520, %v1500, %v1519
    %v1522 = vrot.slane %v1516, 7
    %v1523 = vsel %vm789, %v1522, %v1521
    %vm1524 = vcmask 1043459
    %v1525 = vsel %vm1524, %v1522, %v1523
    %vm1526 = vcmask 1045509
    %v1527 = vsel %vm1526, %v1522, %v1525
    %vm1528 = vcmask 1047559
    %v1529 = vsel %vm1528, %v1522, %v1527
    %1531 = vst [vmem:[#allocation8] sm:$0x3f] %v1529
    %v1532 = vsel %vm1517, %v1419, %v1407
    %v1533 = vsel %vm1517, %v1421, %v1408
    %v1534 = vsel %vm1517, %v1423, %v1409
    %vm1538 = vcmask 1042433
    %v1539 = vsel %vm1538, %v1532, 0.0
    %v1540 = vsel %vm1538, %v1533, 0.0
    %v1541 = vadd.f32 %v1539, %v1540
    %v1542 = vsel %vm1538, %v1534, 0.0
    %v1543 = vadd.f32 %v1541, %v1542
    %1544 = vadd.xlane.f32.xlu0 %v1543
    %v1545 = vpop.xlane.xlu0 %1544
    %v1546 = vrsqrt.pop %v1545
    %v1548 = vrot.slane %v1546, 1
    %v1551 = vmul.f32 %v419, %v1546
    %v1552 = vmul.f32 %v421, %v1546
    %v1553 = vmul.f32 %v490, %v1546
    %v1554 = vmul.f32 %v563, %v1548
    %v1555 = vmul.f32 %v565, %v1548
    %v1556 = vmul.f32 %v634, %v1548
    %v1557 = vmul.f32 %v1404, %v1404
    %v1558 = vmul.f32 %v1405, %v1405
    %v1559 = vmul.f32 %v1406, %v1406
    %v1560 = vsel %vm1428, %v1557, 0.0
    %v1561 = vsel %vm1428, %v1558, 0.0
    %v1562 = vadd.f32 %v1560, %v1561
    %v1563 = vsel %vm1428, %v1559, 0.0
    %v1564 = vadd.f32 %v1562, %v1563
    %1565 = vadd.xlane.f32.xlu0 %v1564
    %v1566 = vpop.xlane.xlu0 %1565
    %v1567 = vrsqrt.pop %v1566
    %v1568 = vmul.f32 %v1404, %v1567
    %v1569 = vmul.f32 %v1405, %v1567
    %v1570 = vmul.f32 %v1406, %v1567
    %v1574 = vrot.slane %v1568, 7
    %v1575 = vrot.slane %v1569, 7
    %v1576 = vrot.slane %v1570, 7
    %v1583 = vadd.f32 %v1551, %v1574
    %v1584 = vadd.f32 %v1552, %v1575
    %v1585 = vadd.f32 %v1553, %v1576
    %v1586 = vadd.f32 %v1554, %v1568
    %v1587 = vadd.f32 %v1555, %v1569
    %v1588 = vadd.f32 %v1556, %v1570
    %v1595 = vcombine.low %v1583, %v1584
    %v1597 = vunpack.c.l.s4 1983009808
    %v1598 = vunpack.c.0.s8 %v1597
    %v1599 = vlaneseq
    %v1600 = vshrl.u32 %v1599, 7
    %v1601 = vsub.s32 %v1598, %v1600
    %v1602 = vrot.slane %v1595, %v1601
    %v1604 = vunpack.c.l.s4 1983009808
    %v1605 = vunpack.c.0.s8 %v1604
    %v1606 = vlaneseq
    %v1607 = vshrl.u32 %v1606, 7
    %v1608 = vsub.s32 %v1605, %v1607
    %v1609 = vrot.slane %v1585, %v1608
    %v1610 = vcombine.low %v1602, %v1609
    %v1611 = vcombine.low %v1586, %v1587
    %v1613 = vunpack.c.l.s4 1983009808
    %v1614 = vunpack.c.0.s8 %v1613
    %v1615 = vlaneseq
    %v1616 = vshrl.u32 %v1615, 7
    %v1617 = vsub.s32 %v1614, %v1616
    %v1618 = vrot.slane %v1611, %v1617
    %v1620 = vunpack.c.l.s4 1983009808
    %v1621 = vunpack.c.0.s8 %v1620
    %v1622 = vlaneseq
    %v1623 = vshrl.u32 %v1622, 7
    %v1624 = vsub.s32 %v1621, %v1623
    %v1625 = vrot.slane %v1588, %v1624
    %v1626 = vcombine.low %v1618, %v1625
    %v1627 = vrot.slane %v1610, 1
    %v1628 = vsel %vm1518, %v1627, %v1627
    %v1629 = vsel %vm1520, %v1627, %v1628
    %v1630 = vsel %vm789, %v1626, %v1629
    %v1631 = vsel %vm1524, %v1626, %v1630
    %v1632 = vsel %vm1526, %v1626, %v1631
    %v1633 = vsel %vm1528, %v1626, %v1632
    %s1635 = scalar_lea.vmem [#allocation8], 6
    %1636 = vst [vmem:[%s1635] sm:$0x3f] %v1633
    // Predicated region
    $region30: #{tpu_custom_call.1} parent=1 // pred_check
      _
    $region31: #{tpu_custom_call.1} parent=1 // pred_check_branch
      %1638 = sbr.rel (0) target = $region33
    $region32: #{tpu_custom_call.1} parent=1 // pred_region
      %s1640 = ssub.s32 192, 192
      %1641 = vsyncadd [#allocation4], %s1640
      %s1642 = sshll.u32 [#allocation8], 4
      %s1643 = int_to_ptr.vmem [resolvable:$true] %s1642
      %1648 = dma.vmem_to_hbm [thread:$0]  %s1643, 192, %s4, [#allocation4], 96, 96, 6
    $region33: #{tpu_custom_call.1} parent=1 // pred_fallthru
      _
    // Predicated region
    $region34: #{tpu_custom_call.1} parent=1 // pred_check
      _
    $region35: #{tpu_custom_call.1} parent=1 // pred_check_branch
      %1650 = sbr.rel (0) target = $region37
    $region36: #{tpu_custom_call.1} parent=1 // pred_region
      %1651 = dma.done [#allocation4], 192
    $region37: #{tpu_custom_call.1} parent=1 // pred_fallthru
      _
    %1652 = vsyncpa [#allocation3], 1
    %1653 = vsyncpa [#allocation6], 1
    %1654 = vsyncpa [#allocation4], 1

</llo_original>
